<compile_context>
chip_gen: v6e
topology: v6e:2x2x1
jax: 0.10.0
libtpu: 0.0.40
codegen_flags: <defaults>
</compile_context>

<pallas_src>
import functools

import jax
import jax.numpy as jnp
from jax import lax
from jax.experimental import pallas as pl
from jax.experimental.pallas import tpu as pltpu

NUM_BLOCKS = 3
BN_EPS = 1e-5
OUT_PAD = 128  # lane-dense padding for the (H, 1) output layer


def _deepnet_kernel(
    x_ref,       # (TB, IN)        f32
    in_w_ref,    # (IN, H)         bf16
    in_b_ref,    # (1, H)          f32
    fc1_w_ref,   # (H, 4H)         bf16   (block k, BN folded in)
    fc1_b_ref,   # (1, 4H)         f32    (block k, BN folded in)
    fc2_w_ref,   # (4H, H)         bf16   (block k)
    fc2_b_ref,   # (1, H)          f32    (block k)
    out_w_ref,   # (H, OUT_PAD)    bf16   (zero-padded beyond col 0)
    out_b_ref,   # (1, OUT_PAD)    f32
    o_ref,       # (TB, OUT_PAD)   f32
    h_ref,       # scratch (TB, H) f32 -- carried across the block axis
):
    k = pl.program_id(1)
    nb = pl.num_programs(1)

    # input_layer: Linear(input_size, hidden) -- only once per batch tile.
    @pl.when(k == 0)
    def _():
        h_ref[...] = (
            jnp.dot(
                x_ref[...].astype(jnp.bfloat16),
                in_w_ref[...],
                preferred_element_type=jnp.float32,
            )
            + in_b_ref[...]
        )

    # residual block k: (BN folded into fc1) -> ReLU -> (Dropout=identity) -> fc2 -> +res
    h = h_ref[...]
    a = (
        jnp.dot(
            h.astype(jnp.bfloat16),
            fc1_w_ref[...],
            preferred_element_type=jnp.float32,
        )
        + fc1_b_ref[...]
    )
    a = jnp.maximum(a, 0.0)
    # Dropout: identity in eval mode.
    h = (
        jnp.dot(
            a.astype(jnp.bfloat16),
            fc2_w_ref[...],
            preferred_element_type=jnp.float32,
        )
        + fc2_b_ref[...]
        + h
    )
    h_ref[...] = h

    # output_layer: Linear(hidden, 1), padded to 128 lanes for a dense store.
    @pl.when(k == nb - 1)
    def _():
        o_ref[...] = (
            jnp.dot(
                h.astype(jnp.bfloat16),
                out_w_ref[...],
                preferred_element_type=jnp.float32,
            )
            + out_b_ref[...]
        )


@functools.partial(jax.jit, static_argnames=("block_batch",))
def deepnet_forward(x, kp, *, block_batch=256):
    B, IN = x.shape
    H = kp["in_w"].shape[1]
    H4 = kp["fc1_w"].shape[2]
    NB = kp["fc1_w"].shape[0]

    # Pick batch tile: full (8-padded) batch if small, else 256-row tiles.
    if B <= block_batch:
        b_pad = max(8, -(-B // 8) * 8)
        tb = b_pad
    else:
        tb = block_batch
        b_pad = -(-B // tb) * tb
    if b_pad != B:
        x = jnp.pad(x, ((0, b_pad - B), (0, 0)))
    num_tiles = b_pad // tb

    out = pl.pallas_call(
        _deepnet_kernel,
        out_shape=jax.ShapeDtypeStruct((b_pad, OUT_PAD), jnp.float32),
        grid_spec=pltpu.PrefetchScalarGridSpec(
            num_scalar_prefetch=0,
            grid=(num_tiles, NB),
            in_specs=[
                pl.BlockSpec((tb, IN), lambda b, k: (b, 0)),        # x: tiled over batch
                pl.BlockSpec((IN, H), lambda b, k: (0, 0)),         # in_w: resident
                pl.BlockSpec((1, H), lambda b, k: (0, 0)),          # in_b: resident
                pl.BlockSpec((None, H, H4), lambda b, k: (k, 0, 0)),   # fc1_w[k]: streamed
                pl.BlockSpec((None, 1, H4), lambda b, k: (k, 0, 0)),   # fc1_b[k]
                pl.BlockSpec((None, H4, H), lambda b, k: (k, 0, 0)),   # fc2_w[k]: streamed
                pl.BlockSpec((None, 1, H), lambda b, k: (k, 0, 0)),    # fc2_b[k]
                pl.BlockSpec((H, OUT_PAD), lambda b, k: (0, 0)),    # out_w: resident
                pl.BlockSpec((1, OUT_PAD), lambda b, k: (0, 0)),    # out_b: resident
            ],
            out_specs=pl.BlockSpec((tb, OUT_PAD), lambda b, k: (b, 0)),
            scratch_shapes=[pltpu.VMEM((tb, H), jnp.float32)],
        ),
        compiler_params=pltpu.CompilerParams(
            dimension_semantics=("parallel", "arbitrary"),
            vmem_limit_bytes=64 * 1024 * 1024,
        ),
    )(
        x,
        kp["in_w"], kp["in_b"],
        kp["fc1_w"], kp["fc1_b"],
        kp["fc2_w"], kp["fc2_b"],
        kp["out_w"], kp["out_b"],
    )
    return out[:B, :1]


def init_params(key, input_size, hidden):
    """Deterministic synthetic parameters in PyTorch layout (weight = (out, in))."""
    ks = jax.random.split(key, 14)
    h4 = hidden * 4
    s = 0.05
    return {
        "in_w": s * jax.random.normal(ks[0], (hidden, input_size), jnp.float32),
        "in_b": s * jax.random.normal(ks[1], (hidden,), jnp.float32),
        # Non-trivial BN running stats so the fold is actually exercised.
        "bn_gamma": 1.0 + 0.1 * jax.random.normal(ks[2], (NUM_BLOCKS, hidden), jnp.float32),
        "bn_beta": 0.1 * jax.random.normal(ks[3], (NUM_BLOCKS, hidden), jnp.float32),
        "bn_mean": 0.1 * jax.random.normal(ks[4], (NUM_BLOCKS, hidden), jnp.float32),
        "bn_var": jax.random.uniform(ks[5], (NUM_BLOCKS, hidden), jnp.float32, 0.5, 1.5),
        "fc1_w": s * jax.random.normal(ks[6], (NUM_BLOCKS, h4, hidden), jnp.float32),
        "fc1_b": s * jax.random.normal(ks[7], (NUM_BLOCKS, h4), jnp.float32),
        "fc2_w": s * jax.random.normal(ks[8], (NUM_BLOCKS, hidden, h4), jnp.float32),
        "fc2_b": s * jax.random.normal(ks[9], (NUM_BLOCKS, hidden), jnp.float32),
        "out_w": s * jax.random.normal(ks[10], (1, hidden), jnp.float32),
        "out_b": s * jax.random.normal(ks[11], (1,), jnp.float32),
    }


def prepare_kernel_params(raw):
    """One-time offline transform: transpose to (in, out), fold eval-mode BN into fc1,
    pad the output layer to OUT_PAD lanes, cast weights to bf16 (biases stay f32)."""
    in_w = raw["in_w"].T                                   # (IN, H)
    in_b = raw["in_b"].reshape(1, -1)                      # (1, H)
    fc1_w = jnp.transpose(raw["fc1_w"], (0, 2, 1))         # (NB, H, 4H)
    fc1_b = raw["fc1_b"][:, None, :]                       # (NB, 1, 4H)
    fc2_w = jnp.transpose(raw["fc2_w"], (0, 2, 1))         # (NB, 4H, H)
    fc2_b = raw["fc2_b"][:, None, :]                       # (NB, 1, H)

    # Fold BN: ((h - mean) * rsqrt(var+eps) * gamma + beta) @ W1 + b1
    #        =  h @ (scale[:,None] * W1) + ((beta - mean*scale) @ W1 + b1)
    scale = raw["bn_gamma"] * lax.rsqrt(raw["bn_var"] + BN_EPS)   # (NB, H)
    shift = raw["bn_beta"] - raw["bn_mean"] * scale               # (NB, H)
    fc1_w_f = scale[:, :, None] * fc1_w
    fc1_b_f = fc1_b + jnp.einsum("nh,nhf->nf", shift, fc1_w)[:, None, :]

    hidden = in_w.shape[1]
    out_w_p = jnp.zeros((hidden, OUT_PAD), jnp.float32).at[:, :1].set(raw["out_w"].T)
    out_b_p = jnp.zeros((1, OUT_PAD), jnp.float32).at[:, 0].set(raw["out_b"])

    return {
        "in_w": in_w.astype(jnp.bfloat16),
        "in_b": in_b,
        "fc1_w": fc1_w_f.astype(jnp.bfloat16),
        "fc1_b": fc1_b_f,
        "fc2_w": fc2_w.astype(jnp.bfloat16),
        "fc2_b": fc2_b,
        "out_w": out_w_p.astype(jnp.bfloat16),
        "out_b": out_b_p,
    }


def reference_forward(x, raw):
    """Pure-JAX f32 reference (explicit BN, un-folded, un-padded)."""
    h = x @ raw["in_w"].T + raw["in_b"]
    for i in range(NUM_BLOCKS):
        xn = (
            (h - raw["bn_mean"][i]) * lax.rsqrt(raw["bn_var"][i] + BN_EPS)
            * raw["bn_gamma"][i] + raw["bn_beta"][i]
        )
        a = jnp.maximum(xn @ raw["fc1_w"][i].T + raw["fc1_b"][i], 0.0)
        h = a @ raw["fc2_w"][i].T + raw["fc2_b"][i] + h
    return h @ raw["out_w"].T + raw["out_b"]


if __name__ == "__main__":
    key = jax.random.PRNGKey(0)
    k_x, k_p = jax.random.split(key)

    batch, input_size, hidden = 64, 16, 128  # hidden matches the PyTorch default
    x = jax.random.normal(k_x, (batch, input_size), jnp.float32)
    raw = init_params(k_p, input_size, hidden)
    kp = prepare_kernel_params(raw)

    out = jax.block_until_ready(deepnet_forward(x, kp))
    ref = reference_forward(x, raw)

    assert out.shape == (batch, 1), out.shape
    max_err = jnp.max(jnp.abs(out - ref))
    assert jnp.allclose(out, ref, atol=2e-2, rtol=2e-2), f"max abs diff {max_err}"

    print("KERNEL_OK")
</pallas_src>

<mosaic_0001>
module attributes {stable_mosaic.version = 11 : i64} {
  func.func @_deepnet_kernel(%arg0: i32, %arg1: i32, %arg2: memref<64x16xf32, #tpu.memory_space<vmem>>, %arg3: memref<16x128xbf16, #tpu.memory_space<vmem>>, %arg4: memref<1x128xf32, #tpu.memory_space<vmem>>, %arg5: memref<1x128x512xbf16, #tpu.memory_space<vmem>>, %arg6: memref<1x1x512xf32, #tpu.memory_space<vmem>>, %arg7: memref<1x512x128xbf16, #tpu.memory_space<vmem>>, %arg8: memref<1x1x128xf32, #tpu.memory_space<vmem>>, %arg9: memref<128x128xbf16, #tpu.memory_space<vmem>>, %arg10: memref<1x128xf32, #tpu.memory_space<vmem>>, %arg11: memref<64x128xf32, #tpu.memory_space<vmem>>, %arg12: memref<64x128xf32, #tpu.memory_space<vmem>>) attributes {dimension_semantics = [#tpu.dimension_semantics<parallel>, #tpu.dimension_semantics<arbitrary>], iteration_bounds = array<i64: 1, 3>, scalar_prefetch = 0 : i64, scratch_operands = 1 : i64, tpu.core_type = #tpu.core_type<tc>, window_params = [{transform_indices = @transform_0, window_bounds = array<i64: 64, 16>}, {pipeline_mode = #tpu.pipeline_mode<synchronous>, transform_indices = @transform_1, window_bounds = array<i64: 16, 128>}, {pipeline_mode = #tpu.pipeline_mode<synchronous>, transform_indices = @transform_2, window_bounds = array<i64: 1, 128>}, {transform_indices = @transform_3, window_bounds = array<i64: 1, 128, 512>}, {transform_indices = @transform_4, window_bounds = array<i64: 1, 1, 512>}, {transform_indices = @transform_5, window_bounds = array<i64: 1, 512, 128>}, {transform_indices = @transform_6, window_bounds = array<i64: 1, 1, 128>}, {pipeline_mode = #tpu.pipeline_mode<synchronous>, transform_indices = @transform_7, window_bounds = array<i64: 128, 128>}, {pipeline_mode = #tpu.pipeline_mode<synchronous>, transform_indices = @transform_8, window_bounds = array<i64: 1, 128>}, {transform_indices = @transform_9, window_bounds = array<i64: 64, 128>}]} {
    %c0_i32 = arith.constant 0 : i32
    %0 = arith.cmpi eq, %arg1, %c0_i32 : i32
    %1 = arith.extui %0 : i1 to i32
    %c0_i32_0 = arith.constant 0 : i32
    %2 = arith.cmpi ne, %1, %c0_i32_0 : i32
    scf.if %2 {
      %c0_19 = arith.constant 0 : index
      %c0_20 = arith.constant 0 : index
      %27 = vector.load %arg2[%c0_19, %c0_20] : memref<64x16xf32, #tpu.memory_space<vmem>>, vector<64x16xf32>
      %28 = arith.truncf %27 : vector<64x16xf32> to vector<64x16xbf16>
      %c0_21 = arith.constant 0 : index
      %c0_22 = arith.constant 0 : index
      %29 = vector.load %arg3[%c0_21, %c0_22] : memref<16x128xbf16, #tpu.memory_space<vmem>>, vector<16x128xbf16>
      %cst_23 = arith.constant dense<0.000000e+00> : vector<64x128xf32>
      %30 = tpu.matmul %28, %29, %cst_23 {dimension_numbers = #tpu.dot_dimension_numbers<[1], [0], [0], [1], [0, 0, 1, 1], [], []>} : vector<64x16xbf16>, vector<16x128xbf16>, vector<64x128xf32> -> vector<64x128xf32>
      %c0_24 = arith.constant 0 : index
      %c0_25 = arith.constant 0 : index
      %31 = vector.load %arg4[%c0_24, %c0_25] : memref<1x128xf32, #tpu.memory_space<vmem>>, vector<1x128xf32>
      %32 = vector.broadcast %31 : vector<1x128xf32> to vector<64x128xf32>
      %33 = arith.addf %30, %32 : vector<64x128xf32>
      %c0_26 = arith.constant 0 : index
      %c0_27 = arith.constant 0 : index
      %34 = vector.load %arg12[%c0_26, %c0_27] : memref<64x128xf32, #tpu.memory_space<vmem>>, vector<64x128xf32>
      tpu.vector_store %arg12[%c0_26, %c0_27], %33 {strides = array<i32>} : memref<64x128xf32, #tpu.memory_space<vmem>>, vector<64x128xf32>,
    } else {
    }
    %c0 = arith.constant 0 : index
    %c0_1 = arith.constant 0 : index
    %3 = vector.load %arg12[%c0, %c0_1] : memref<64x128xf32, #tpu.memory_space<vmem>>, vector<64x128xf32>
    %4 = arith.truncf %3 : vector<64x128xf32> to vector<64x128xbf16>
    %c0_2 = arith.constant 0 : index
    %c0_3 = arith.constant 0 : index
    %c0_4 = arith.constant 0 : index
    %5 = vector.load %arg5[%c0_2, %c0_3, %c0_4] : memref<1x128x512xbf16, #tpu.memory_space<vmem>>, vector<1x128x512xbf16>
    %6 = vector.shape_cast %5 : vector<1x128x512xbf16> to vector<128x512xbf16>
    %cst = arith.constant dense<0.000000e+00> : vector<64x512xf32>
    %7 = tpu.matmul %4, %6, %cst {dimension_numbers = #tpu.dot_dimension_numbers<[1], [0], [0], [1], [0, 0, 1, 1], [], []>} : vector<64x128xbf16>, vector<128x512xbf16>, vector<64x512xf32> -> vector<64x512xf32>
    %c0_5 = arith.constant 0 : index
    %c0_6 = arith.constant 0 : index
    %c0_7 = arith.constant 0 : index
    %8 = vector.load %arg6[%c0_5, %c0_6, %c0_7] : memref<1x1x512xf32, #tpu.memory_space<vmem>>, vector<1x1x512xf32>
    %9 = vector.shape_cast %8 : vector<1x1x512xf32> to vector<1x512xf32>
    %10 = vector.broadcast %9 : vector<1x512xf32> to vector<64x512xf32>
    %11 = arith.addf %7, %10 : vector<64x512xf32>
    %cst_8 = arith.constant 0.000000e+00 : f32
    %12 = vector.broadcast %cst_8 : f32 to vector<64x512xf32>
    %13 = arith.maximumf %11, %12 : vector<64x512xf32>
    %14 = arith.truncf %13 : vector<64x512xf32> to vector<64x512xbf16>
    %c0_9 = arith.constant 0 : index
    %c0_10 = arith.constant 0 : index
    %c0_11 = arith.constant 0 : index
    %15 = vector.load %arg7[%c0_9, %c0_10, %c0_11] : memref<1x512x128xbf16, #tpu.memory_space<vmem>>, vector<1x512x128xbf16>
    %16 = vector.shape_cast %15 : vector<1x512x128xbf16> to vector<512x128xbf16>
    %cst_12 = arith.constant dense<0.000000e+00> : vector<64x128xf32>
    %17 = tpu.matmul %14, %16, %cst_12 {dimension_numbers = #tpu.dot_dimension_numbers<[1], [0], [0], [1], [0, 0, 1, 1], [], []>} : vector<64x512xbf16>, vector<512x128xbf16>, vector<64x128xf32> -> vector<64x128xf32>
    %c0_13 = arith.constant 0 : index
    %c0_14 = arith.constant 0 : index
    %c0_15 = arith.constant 0 : index
    %18 = vector.load %arg8[%c0_13, %c0_14, %c0_15] : memref<1x1x128xf32, #tpu.memory_space<vmem>>, vector<1x1x128xf32>
    %19 = vector.shape_cast %18 : vector<1x1x128xf32> to vector<1x128xf32>
    %20 = vector.broadcast %19 : vector<1x128xf32> to vector<64x128xf32>
    %21 = arith.addf %17, %20 : vector<64x128xf32>
    %22 = arith.addf %21, %3 : vector<64x128xf32>
    %c0_16 = arith.constant 0 : index
    %c0_17 = arith.constant 0 : index
    %23 = vector.load %arg12[%c0_16, %c0_17] : memref<64x128xf32, #tpu.memory_space<vmem>>, vector<64x128xf32>
    tpu.vector_store %arg12[%c0_16, %c0_17], %22 {strides = array<i32>} : memref<64x128xf32, #tpu.memory_space<vmem>>, vector<64x128xf32>,
    %c2_i32 = arith.constant 2 : i32
    %24 = arith.cmpi eq, %arg1, %c2_i32 : i32
    %25 = arith.extui %24 : i1 to i32
    %c0_i32_18 = arith.constant 0 : i32
    %26 = arith.cmpi ne, %25, %c0_i32_18 : i32
    scf.if %26 {
      %27 = arith.truncf %22 : vector<64x128xf32> to vector<64x128xbf16>
      %c0_19 = arith.constant 0 : index
      %c0_20 = arith.constant 0 : index
      %28 = vector.load %arg9[%c0_19, %c0_20] : memref<128x128xbf16, #tpu.memory_space<vmem>>, vector<128x128xbf16>
      %cst_21 = arith.constant dense<0.000000e+00> : vector<64x128xf32>
      %29 = tpu.matmul %27, %28, %cst_21 {dimension_numbers = #tpu.dot_dimension_numbers<[1], [0], [0], [1], [0, 0, 1, 1], [], []>} : vector<64x128xbf16>, vector<128x128xbf16>, vector<64x128xf32> -> vector<64x128xf32>
      %c0_22 = arith.constant 0 : index
      %c0_23 = arith.constant 0 : index
      %30 = vector.load %arg10[%c0_22, %c0_23] : memref<1x128xf32, #tpu.memory_space<vmem>>, vector<1x128xf32>
      %31 = vector.broadcast %30 : vector<1x128xf32> to vector<64x128xf32>
      %32 = arith.addf %29, %31 : vector<64x128xf32>
      %c0_24 = arith.constant 0 : index
      %c0_25 = arith.constant 0 : index
      %33 = vector.load %arg11[%c0_24, %c0_25] : memref<64x128xf32, #tpu.memory_space<vmem>>, vector<64x128xf32>
      tpu.vector_store %arg11[%c0_24, %c0_25], %32 {strides = array<i32>} : memref<64x128xf32, #tpu.memory_space<vmem>>, vector<64x128xf32>,
    } else {
    }
    return
  }
  func.func @transform_0(%arg0: i32, %arg1: i32) -> (i32, i32) {
    %c0_i32 = arith.constant 0 : i32
    %c0_i32_0 = arith.constant 0 : i32
    return %arg0, %c0_i32 : i32, i32
  }
  func.func @transform_1(%arg0: i32, %arg1: i32) -> (i32, i32) {
    %c0_i32 = arith.constant 0 : i32
    %c0_i32_0 = arith.constant 0 : i32
    %c0_i32_1 = arith.constant 0 : i32
    return %c0_i32, %c0_i32_0 : i32, i32
  }
  func.func @transform_2(%arg0: i32, %arg1: i32) -> (i32, i32) {
    %c0_i32 = arith.constant 0 : i32
    %c0_i32_0 = arith.constant 0 : i32
    %c0_i32_1 = arith.constant 0 : i32
    return %c0_i32, %c0_i32_0 : i32, i32
  }
  func.func @transform_3(%arg0: i32, %arg1: i32) -> (i32, i32, i32) {
    %c0_i32 = arith.constant 0 : i32
    %c0_i32_0 = arith.constant 0 : i32
    %c0_i32_1 = arith.constant 0 : i32
    return %arg1, %c0_i32, %c0_i32_0 : i32, i32, i32
  }
  func.func @transform_4(%arg0: i32, %arg1: i32) -> (i32, i32, i32) {
    %c0_i32 = arith.constant 0 : i32
    %c0_i32_0 = arith.constant 0 : i32
    %c0_i32_1 = arith.constant 0 : i32
    return %arg1, %c0_i32, %c0_i32_0 : i32, i32, i32
  }
  func.func @transform_5(%arg0: i32, %arg1: i32) -> (i32, i32, i32) {
    %c0_i32 = arith.constant 0 : i32
    %c0_i32_0 = arith.constant 0 : i32
    %c0_i32_1 = arith.constant 0 : i32
    return %arg1, %c0_i32, %c0_i32_0 : i32, i32, i32
  }
  func.func @transform_6(%arg0: i32, %arg1: i32) -> (i32, i32, i32) {
    %c0_i32 = arith.constant 0 : i32
    %c0_i32_0 = arith.constant 0 : i32
    %c0_i32_1 = arith.constant 0 : i32
    return %arg1, %c0_i32, %c0_i32_0 : i32, i32, i32
  }
  func.func @transform_7(%arg0: i32, %arg1: i32) -> (i32, i32) {
    %c0_i32 = arith.constant 0 : i32
    %c0_i32_0 = arith.constant 0 : i32
    %c0_i32_1 = arith.constant 0 : i32
    return %c0_i32, %c0_i32_0 : i32, i32
  }
  func.func @transform_8(%arg0: i32, %arg1: i32) -> (i32, i32) {
    %c0_i32 = arith.constant 0 : i32
    %c0_i32_0 = arith.constant 0 : i32
    %c0_i32_1 = arith.constant 0 : i32
    return %c0_i32, %c0_i32_0 : i32, i32
  }
  func.func @transform_9(%arg0: i32, %arg1: i32) -> (i32, i32) {
    %c0_i32 = arith.constant 0 : i32
    %c0_i32_0 = arith.constant 0 : i32
    return %arg0, %c0_i32 : i32, i32
  }
}

</mosaic_0001>

<llo_original>
// kernel: deepnet_forward.1
$region0: #{deepnet_forward.1}
  #allocation0 [shape = 'u32[]', space=smem, size = 0x4, offset = 0x4, fixed_abs, tag = 'smem constant byte address 0x4 - core index']
  #allocation1 [shape = 'u32[144,128]{1,0:T(1,128)}', space=vmem, size = 0x12000, scoped, tag = 'internal scratch']
  #allocation2 [shape = 'f32[64,128]{1,0:T(8,128)}', space=vmem, size = 0x8000, scoped, tag = 'scratch operand']
  %s0 = inlined_call_operand.vmem [shape: f32[64,16], index: 0, kind: input, shape index: {}]
  %s1 = inlined_call_operand.vmem [shape: bf16[16,128], index: 1, kind: input, shape index: {}]
  %s2 = inlined_call_operand.vmem [shape: f32[1,128], index: 2, kind: input, shape index: {}]
  %s3 = inlined_call_operand.hbm [shape: bf16[3,128,512], index: 3, kind: input, shape index: {}]
  %s4 = inlined_call_operand.vmem [shape: f32[3,1,512], index: 4, kind: input, shape index: {}]
  %s5 = inlined_call_operand.hbm [shape: bf16[3,512,128], index: 5, kind: input, shape index: {}]
  %s6 = inlined_call_operand.vmem [shape: f32[3,1,128], index: 6, kind: input, shape index: {}]
  %s7 = inlined_call_operand.vmem [shape: bf16[128,128], index: 7, kind: input, shape index: {}]
  %s8 = inlined_call_operand.vmem [shape: f32[1,128], index: 8, kind: input, shape index: {}]
  %s9 = inlined_call_operand.vmem [shape: f32[64,128], index: 9, kind: output, shape index: {}]
  %s10 = sld [smem:[#allocation0]]
  $region85: #{deepnet_forward.1} parent=0
    _
  %s12 = ssub.s32 1, %s10
  %s13 = scalar_select 0, %s12, %s10
  $region1: #{deepnet_forward.1} parent=0
    #allocation3 [shape = 'u8[262144]{0}', space=vmem, size = 0x40000, scoped, tag = 'input window, operand 3']
    #allocation4 [shape = 's32[2]{0}', space=sflag, size = 0x8, scoped, tag = 'scoped memory for deepnet_forward.1']
    #allocation5 [shape = 'u8[262144]{0}', space=vmem, size = 0x40000, scoped, tag = 'input window, operand 5']
    #allocation6 [shape = 's32[2]{0}', space=sflag, size = 0x8, scoped, tag = 'scoped memory for deepnet_forward.1']
    %14 = vsyncpa [#allocation4], 0
    %s15 = scalar_lea.sflag [#allocation4], 1
    %16 = vsyncpa %s15, 0
    %17 = vsyncpa [#allocation6], 0
    %s18 = scalar_lea.sflag [#allocation6], 1
    %19 = vsyncpa %s18, 0
    loop: start=0, step=1, limit=5
    $region2: #{deepnet_forward.1} parent=1 // loop_pre_header
      _
    $region3: #{deepnet_forward.1} parent=1 // loop_header
      %s21 = sphi 0, %s25
      %p22 = scmp.ge.s32.totalorder %s21, 5
      %s28 = sphi 0, %s40
      %s29 = sphi 0, %s36
      %s30 = sphi 0, %s28
      %s31 = sphi 0, %s29
      %s32 = sphi 0, %s30
      %s33 = sphi 0, %s31
      %s43 = sphi 0, %s45
      %s46 = sphi 0, %s43
      %s47 = sphi 0, %s46
      %s63 = sphi 0, %s47
      %s67 = sphi 0, %s67
      %s69 = sphi 0, %s67
      %s70 = sphi 0, %s69
      %s84 = sphi 0, %s70
      %s88 = sphi 0, %s88
      %s90 = sphi 0, %s88
      %s91 = sphi 0, %s90
      %s105 = sphi 0, %s91
      %s111 = sphi 0, %s113
      %s114 = sphi 0, %s111
      %s115 = sphi 0, %s114
      %s131 = sphi 0, %s115
      %s137 = sphi 0, %s139
      %s140 = sphi 0, %s137
      %s141 = sphi 0, %s140
      %s157 = sphi 0, %s141
      %s163 = sphi 0, %s165
      %s166 = sphi 0, %s163
      %s167 = sphi 0, %s166
      %s183 = sphi 0, %s167
      %s189 = sphi 0, %s191
      %s192 = sphi 0, %s189
      %s193 = sphi 0, %s192
      %s209 = sphi 0, %s193
      %s213 = sphi 0, %s213
      %s215 = sphi 0, %s213
      %s216 = sphi 0, %s215
      %s230 = sphi 0, %s216
      %s234 = sphi 0, %s234
      %s236 = sphi 0, %s234
      %s237 = sphi 0, %s236
      %s251 = sphi 0, %s237
      %s257 = sphi 0, %s259
      %s260 = sphi 0, %s257
      %s261 = sphi 0, %s260
      %s277 = sphi 0, %s261
    $region4: #{deepnet_forward.1} parent=1 // loop_header_branch
      %24 = sbr.rel (%p22) target = $region8
    $region5: #{deepnet_forward.1} parent=1 // loop_body
      %s26 = ssub.s32 %s21, 1
      %s27 = ssub.s32 %s21, 2
      %s34 = sadd.s32 1, %s29
      %p35 = scmp.ge.s32.totalorder %s34, 3
      %s36 = scalar_select %p35, 0, %s34
      %s37 = sadd.s32 1, %s28
      %s38 = scalar_select %p35, %s37, %s28
      %p39 = scmp.ge.s32.totalorder %s38, 1
      %s40 = scalar_select %p39, 0, %s38
      %s41 = ssub.s32 %s28, %s40
      %p42 = scmp.eq.s32.totalorder %s41, 0
      %s44 = sadd.s32 %s43, 1
      %s45 = scalar_select %p42, %s43, %s44
      %p48 = pneg %p42
      %p49 = scmp.eq.s32.totalorder %s21, 2
      %p50 = por %p48, %p49
      %p51 = scmp.ne.s32.totalorder %s43, %s46
      %p52 = scmp.eq.s32.totalorder %s21, 0
      %p53 = por %p51, %p52
      %p54 = scmp.ne.s32.totalorder %s43, %s46
      %p55 = scmp.eq.s32.totalorder %s26, 2
      %p56 = por %p54, %p55
      %p57 = scmp.ne.s32.totalorder %s46, %s47
      %p58 = scmp.eq.s32.totalorder %s26, 0
      %p59 = por %p57, %p58
      %p60 = scmp.ne.s32.totalorder %s46, %s47
      %p61 = scmp.eq.s32.totalorder %s27, 2
      %p62 = por %p60, %p61
      %p64 = scmp.ne.s32.totalorder %s47, %s63
      %p65 = scmp.eq.s32.totalorder %s27, 0
      %p66 = por %p64, %p65
      %s68 = sadd.s32 %s67, 1
      %p71 = scmp.eq.s32.totalorder %s21, 2
      %p72 = scmp.ne.s32.totalorder %s67, %s69
      %p73 = scmp.eq.s32.totalorder %s21, 0
      %p74 = por %p72, %p73
      %p75 = scmp.ne.s32.totalorder %s67, %s69
      %p76 = scmp.eq.s32.totalorder %s26, 2
      %p77 = por %p75, %p76
      %p78 = scmp.ne.s32.totalorder %s69, %s70
      %p79 = scmp.eq.s32.totalorder %s26, 0
      %p80 = por %p78, %p79
      %p81 = scmp.ne.s32.totalorder %s69, %s70
      %p82 = scmp.eq.s32.totalorder %s27, 2
      %p83 = por %p81, %p82
      %p85 = scmp.ne.s32.totalorder %s70, %s84
      %p86 = scmp.eq.s32.totalorder %s27, 0
      %p87 = por %p85, %p86
      %s89 = sadd.s32 %s88, 1
      %p92 = scmp.eq.s32.totalorder %s21, 2
      %p93 = scmp.ne.s32.totalorder %s88, %s90
      %p94 = scmp.eq.s32.totalorder %s21, 0
      %p95 = por %p93, %p94
      %p96 = scmp.ne.s32.totalorder %s88, %s90
      %p97 = scmp.eq.s32.totalorder %s26, 2
      %p98 = por %p96, %p97
      %p99 = scmp.ne.s32.totalorder %s90, %s91
      %p100 = scmp.eq.s32.totalorder %s26, 0
      %p101 = por %p99, %p100
      %p102 = scmp.ne.s32.totalorder %s90, %s91
      %p103 = scmp.eq.s32.totalorder %s27, 2
      %p104 = por %p102, %p103
      %p106 = scmp.ne.s32.totalorder %s91, %s105
      %p107 = scmp.eq.s32.totalorder %s27, 0
      %p108 = por %p106, %p107
      %s109 = ssub.s32 %s29, %s36
      %p110 = scmp.eq.s32.totalorder %s109, 0
      %s112 = sadd.s32 %s111, 1
      %s113 = scalar_select %p110, %s111, %s112
      %p116 = pneg %p110
      %p117 = scmp.eq.s32.totalorder %s21, 2
      %p118 = por %p116, %p117
      %p119 = scmp.ne.s32.totalorder %s111, %s114
      %p120 = scmp.eq.s32.totalorder %s21, 0
      %p121 = por %p119, %p120
      %p122 = scmp.ne.s32.totalorder %s111, %s114
      %p123 = scmp.eq.s32.totalorder %s26, 2
      %p124 = por %p122, %p123
      %p125 = scmp.ne.s32.totalorder %s114, %s115
      %p126 = scmp.eq.s32.totalorder %s26, 0
      %p127 = por %p125, %p126
      %p128 = scmp.ne.s32.totalorder %s114, %s115
      %p129 = scmp.eq.s32.totalorder %s27, 2
      %p130 = por %p128, %p129
      %p132 = scmp.ne.s32.totalorder %s115, %s131
      %p133 = scmp.eq.s32.totalorder %s27, 0
      %p134 = por %p132, %p133
      %s135 = ssub.s32 %s29, %s36
      %p136 = scmp.eq.s32.totalorder %s135, 0
      %s138 = sadd.s32 %s137, 1
      %s139 = scalar_select %p136, %s137, %s138
      %p142 = pneg %p136
      %p143 = scmp.eq.s32.totalorder %s21, 2
      %p144 = por %p142, %p143
      %p145 = scmp.ne.s32.totalorder %s137, %s140
      %p146 = scmp.eq.s32.totalorder %s21, 0
      %p147 = por %p145, %p146
      %p148 = scmp.ne.s32.totalorder %s137, %s140
      %p149 = scmp.eq.s32.totalorder %s26, 2
      %p150 = por %p148, %p149
      %p151 = scmp.ne.s32.totalorder %s140, %s141
      %p152 = scmp.eq.s32.totalorder %s26, 0
      %p153 = por %p151, %p152
      %p154 = scmp.ne.s32.totalorder %s140, %s141
      %p155 = scmp.eq.s32.totalorder %s27, 2
      %p156 = por %p154, %p155
      %p158 = scmp.ne.s32.totalorder %s141, %s157
      %p159 = scmp.eq.s32.totalorder %s27, 0
      %p160 = por %p158, %p159
      %s161 = ssub.s32 %s29, %s36
      %p162 = scmp.eq.s32.totalorder %s161, 0
      %s164 = sadd.s32 %s163, 1
      %s165 = scalar_select %p162, %s163, %s164
      %p168 = pneg %p162
      %p169 = scmp.eq.s32.totalorder %s21, 2
      %p170 = por %p168, %p169
      %p171 = scmp.ne.s32.totalorder %s163, %s166
      %p172 = scmp.eq.s32.totalorder %s21, 0
      %p173 = por %p171, %p172
      %p174 = scmp.ne.s32.totalorder %s163, %s166
      %p175 = scmp.eq.s32.totalorder %s26, 2
      %p176 = por %p174, %p175
      %p177 = scmp.ne.s32.totalorder %s166, %s167
      %p178 = scmp.eq.s32.totalorder %s26, 0
      %p179 = por %p177, %p178
      %p180 = scmp.ne.s32.totalorder %s166, %s167
      %p181 = scmp.eq.s32.totalorder %s27, 2
      %p182 = por %p180, %p181
      %p184 = scmp.ne.s32.totalorder %s167, %s183
      %p185 = scmp.eq.s32.totalorder %s27, 0
      %p186 = por %p184, %p185
      %s187 = ssub.s32 %s29, %s36
      %p188 = scmp.eq.s32.totalorder %s187, 0
      %s190 = sadd.s32 %s189, 1
      %s191 = scalar_select %p188, %s189, %s190
      %p194 = pneg %p188
      %p195 = scmp.eq.s32.totalorder %s21, 2
      %p196 = por %p194, %p195
      %p197 = scmp.ne.s32.totalorder %s189, %s192
      %p198 = scmp.eq.s32.totalorder %s21, 0
      %p199 = por %p197, %p198
      %p200 = scmp.ne.s32.totalorder %s189, %s192
      %p201 = scmp.eq.s32.totalorder %s26, 2
      %p202 = por %p200, %p201
      %p203 = scmp.ne.s32.totalorder %s192, %s193
      %p204 = scmp.eq.s32.totalorder %s26, 0
      %p205 = por %p203, %p204
      %p206 = scmp.ne.s32.totalorder %s192, %s193
      %p207 = scmp.eq.s32.totalorder %s27, 2
      %p208 = por %p206, %p207
      %p210 = scmp.ne.s32.totalorder %s193, %s209
      %p211 = scmp.eq.s32.totalorder %s27, 0
      %p212 = por %p210, %p211
      %s214 = sadd.s32 %s213, 1
      %p217 = scmp.eq.s32.totalorder %s21, 2
      %p218 = scmp.ne.s32.totalorder %s213, %s215
      %p219 = scmp.eq.s32.totalorder %s21, 0
      %p220 = por %p218, %p219
      %p221 = scmp.ne.s32.totalorder %s213, %s215
      %p222 = scmp.eq.s32.totalorder %s26, 2
      %p223 = por %p221, %p222
      %p224 = scmp.ne.s32.totalorder %s215, %s216
      %p225 = scmp.eq.s32.totalorder %s26, 0
      %p226 = por %p224, %p225
      %p227 = scmp.ne.s32.totalorder %s215, %s216
      %p228 = scmp.eq.s32.totalorder %s27, 2
      %p229 = por %p227, %p228
      %p231 = scmp.ne.s32.totalorder %s216, %s230
      %p232 = scmp.eq.s32.totalorder %s27, 0
      %p233 = por %p231, %p232
      %s235 = sadd.s32 %s234, 1
      %p238 = scmp.eq.s32.totalorder %s21, 2
      %p239 = scmp.ne.s32.totalorder %s234, %s236
      %p240 = scmp.eq.s32.totalorder %s21, 0
      %p241 = por %p239, %p240
      %p242 = scmp.ne.s32.totalorder %s234, %s236
      %p243 = scmp.eq.s32.totalorder %s26, 2
      %p244 = por %p242, %p243
      %p245 = scmp.ne.s32.totalorder %s236, %s237
      %p246 = scmp.eq.s32.totalorder %s26, 0
      %p247 = por %p245, %p246
      %p248 = scmp.ne.s32.totalorder %s236, %s237
      %p249 = scmp.eq.s32.totalorder %s27, 2
      %p250 = por %p248, %p249
      %p252 = scmp.ne.s32.totalorder %s237, %s251
      %p253 = scmp.eq.s32.totalorder %s27, 0
      %p254 = por %p252, %p253
      %s255 = ssub.s32 %s28, %s40
      %p256 = scmp.eq.s32.totalorder %s255, 0
      %s258 = sadd.s32 %s257, 1
      %s259 = scalar_select %p256, %s257, %s258
      %p262 = pneg %p256
      %p263 = scmp.eq.s32.totalorder %s21, 2
      %p264 = por %p262, %p263
      %p265 = scmp.ne.s32.totalorder %s257, %s260
      %p266 = scmp.eq.s32.totalorder %s21, 0
      %p267 = por %p265, %p266
      %p268 = scmp.ne.s32.totalorder %s257, %s260
      %p269 = scmp.eq.s32.totalorder %s26, 2
      %p270 = por %p268, %p269
      %p271 = scmp.ne.s32.totalorder %s260, %s261
      %p272 = scmp.eq.s32.totalorder %s26, 0
      %p273 = por %p271, %p272
      %p274 = scmp.ne.s32.totalorder %s260, %s261
      %p275 = scmp.eq.s32.totalorder %s27, 2
      %p276 = por %p274, %p275
      %p278 = scmp.ne.s32.totalorder %s261, %s277
      %p279 = scmp.eq.s32.totalorder %s27, 0
      %p280 = por %p278, %p279
      %p281 = scmp.le.s32.totalorder 1, %s21
      %p282 = scmp.lt.s32.totalorder %s21, 4
      %p283 = pnand %p281, %p282
      %p284 = pneg %p283
      // Predicated region
      $region9: #{deepnet_forward.1} parent=5 // pred_check
        _
      $region10: #{deepnet_forward.1} parent=5 // pred_check_branch
        %286 = sbr.rel (%p283) target = $region12
      $region11: #{deepnet_forward.1} parent=5 // pred_region
        %s287 = ssub.s32 %s21, 1
        // Predicated region
        $region13: #{deepnet_forward.1} parent=11 // pred_check
          %p288 = pneg %p59
        $region14: #{deepnet_forward.1} parent=11 // pred_check_branch
          %290 = sbr.rel (%p288) target = $region16
        $region15: #{deepnet_forward.1} parent=11 // pred_region
          %s291 = smul.u32 8, %s30
          %p292 = scmp.lt.s32.totalorder %s291, 7
          %s293 = scalar_select %p292, %s291, 7
          %s294 = smul.addr %s293, 8
          %s295 = scalar_lea.vmem %s0, %s294
          %s296 = smul.u32 8, %s30
        $region16: #{deepnet_forward.1} parent=11 // pred_fallthru
          _
        // Predicated region
        $region17: #{deepnet_forward.1} parent=11 // pred_check
          %p297 = pneg %p80
        $region18: #{deepnet_forward.1} parent=11 // pred_check_branch
          %299 = sbr.rel (%p297) target = $region20
        $region19: #{deepnet_forward.1} parent=11 // pred_region
          _
        $region20: #{deepnet_forward.1} parent=11 // pred_fallthru
          _
        // Predicated region
        $region21: #{deepnet_forward.1} parent=11 // pred_check
          %p300 = pneg %p101
        $region22: #{deepnet_forward.1} parent=11 // pred_check_branch
          %302 = sbr.rel (%p300) target = $region24
        $region23: #{deepnet_forward.1} parent=11 // pred_region
          _
        $region24: #{deepnet_forward.1} parent=11 // pred_fallthru
          _
        // Predicated region
        $region25: #{deepnet_forward.1} parent=11 // pred_check
          %p303 = pneg %p226
        $region26: #{deepnet_forward.1} parent=11 // pred_check_branch
          %305 = sbr.rel (%p303) target = $region28
        $region27: #{deepnet_forward.1} parent=11 // pred_region
          _
        $region28: #{deepnet_forward.1} parent=11 // pred_fallthru
          _
        // Predicated region
        $region29: #{deepnet_forward.1} parent=11 // pred_check
          %p306 = pneg %p247
        $region30: #{deepnet_forward.1} parent=11 // pred_check_branch
          %308 = sbr.rel (%p306) target = $region32
        $region31: #{deepnet_forward.1} parent=11 // pred_region
          _
        $region32: #{deepnet_forward.1} parent=11 // pred_fallthru
          _
      $region12: #{deepnet_forward.1} parent=5 // pred_fallthru
        _
      %p309 = scmp.lt.s32.totalorder %s21, 3
      // Predicated region
      $region33: #{deepnet_forward.1} parent=5 // pred_check
        %p310 = pneg %p309
      $region34: #{deepnet_forward.1} parent=5 // pred_check_branch
        %312 = sbr.rel (%p310) target = $region36
      $region35: #{deepnet_forward.1} parent=5 // pred_region
        // Predicated region
        $region37: #{deepnet_forward.1} parent=35 // pred_check
          %p313 = pneg %p121
        $region38: #{deepnet_forward.1} parent=35 // pred_check_branch
          %315 = sbr.rel (%p313) target = $region40
        $region39: #{deepnet_forward.1} parent=35 // pred_region
          %s316 = sand.u32 %s111, 1
          %s317 = scalar_lea.sflag [#allocation4], %s316
          %s318 = sand.u32 %s111, 1
          %s319 = smul.addr %s318, 256
          %s320 = scalar_lea.vmem [#allocation3], %s319
          %s322 = ssub.s32 4096, 4096
          %323 = vsyncadd %s317, %s322
          %s324 = smul.addr %s29, 64
          %s325 = smul.addr %s324, 64
          %s326 = scalar_lea.hbm %s3, %s325
          %s327 = sshll.u32 %s320, 4
          %s328 = int_to_ptr.vmem [resolvable:$true] %s327
          %333 = dma.hbm_to_vmem [thread:$0]  %s326, 4096, %s328, %s317, 256, 256, 16
        $region40: #{deepnet_forward.1} parent=35 // pred_fallthru
          _
        // Predicated region
        $region41: #{deepnet_forward.1} parent=35 // pred_check
          %p334 = pneg %p147
        $region42: #{deepnet_forward.1} parent=35 // pred_check_branch
          %336 = sbr.rel (%p334) target = $region44
        $region43: #{deepnet_forward.1} parent=35 // pred_region
          %p337 = scmp.lt.s32.totalorder %s29, 2
          %s338 = scalar_select %p337, %s29, 2
          %s339 = smul.addr %s338, 4
          %s340 = scalar_lea.vmem %s4, %s339
        $region44: #{deepnet_forward.1} parent=35 // pred_fallthru
          _
        // Predicated region
        $region45: #{deepnet_forward.1} parent=35 // pred_check
          %p341 = pneg %p173
        $region46: #{deepnet_forward.1} parent=35 // pred_check_branch
          %343 = sbr.rel (%p341) target = $region48
        $region47: #{deepnet_forward.1} parent=35 // pred_region
          %s344 = sand.u32 %s163, 1
          %s345 = scalar_lea.sflag [#allocation6], %s344
          %s346 = sand.u32 %s163, 1
          %s347 = smul.addr %s346, 256
          %s348 = scalar_lea.vmem [#allocation5], %s347
          %s350 = ssub.s32 4096, 4096
          %351 = vsyncadd %s345, %s350
          %s352 = smul.addr %s29, 64
          %s353 = smul.addr %s352, 64
          %s354 = scalar_lea.hbm %s5, %s353
          %s355 = sshll.u32 %s348, 4
          %s356 = int_to_ptr.vmem [resolvable:$true] %s355
          %361 = dma.hbm_to_vmem [thread:$0]  %s354, 4096, %s356, %s345, 64, 64, 4
        $region48: #{deepnet_forward.1} parent=35 // pred_fallthru
          _
        // Predicated region
        $region49: #{deepnet_forward.1} parent=35 // pred_check
          %p362 = pneg %p199
        $region50: #{deepnet_forward.1} parent=35 // pred_check_branch
          %364 = sbr.rel (%p362) target = $region52
        $region51: #{deepnet_forward.1} parent=35 // pred_region
          %p365 = scmp.lt.s32.totalorder %s29, 2
          %s366 = scalar_select %p365, %s29, 2
          %s367 = scalar_lea.vmem %s6, %s366
        $region52: #{deepnet_forward.1} parent=35 // pred_fallthru
          _
      $region36: #{deepnet_forward.1} parent=5 // pred_fallthru
        _
      %p368 = scmp.le.s32.totalorder 1, %s21
      %p369 = scmp.lt.s32.totalorder %s21, 4
      %p370 = pnand %p368, %p369
      %p371 = pneg %p370
      // Predicated region
      $region53: #{deepnet_forward.1} parent=5 // pred_check
        _
      $region54: #{deepnet_forward.1} parent=5 // pred_check_branch
        %373 = sbr.rel (%p370) target = $region56
      $region55: #{deepnet_forward.1} parent=5 // pred_region
        %s374 = ssub.s32 %s21, 1
        %s375 = sand.u32 %s114, 1
        %s376 = scalar_lea.sflag [#allocation4], %s375
        %s377 = sand.u32 %s114, 1
        %s378 = smul.addr %s377, 256
        %s379 = scalar_lea.vmem [#allocation3], %s378
        // Predicated region
        $region57: #{deepnet_forward.1} parent=55 // pred_check
          %p380 = pneg %p127
        $region58: #{deepnet_forward.1} parent=55 // pred_check_branch
          %382 = sbr.rel (%p380) target = $region60
        $region59: #{deepnet_forward.1} parent=55 // pred_region
          %383 = dma.done %s376, 4096
        $region60: #{deepnet_forward.1} parent=55 // pred_fallthru
          _
        %s384 = sand.u32 %s166, 1
        %s385 = scalar_lea.sflag [#allocation6], %s384
        %s386 = sand.u32 %s166, 1
        %s387 = smul.addr %s386, 256
        %s388 = scalar_lea.vmem [#allocation5], %s387
        // Predicated region
        $region61: #{deepnet_forward.1} parent=55 // pred_check
          %p389 = pneg %p179
        $region62: #{deepnet_forward.1} parent=55 // pred_check_branch
          %391 = sbr.rel (%p389) target = $region64
        $region63: #{deepnet_forward.1} parent=55 // pred_region
          %392 = dma.done %s385, 4096
        $region64: #{deepnet_forward.1} parent=55 // pred_fallthru
          _
        %s393 = smul.u32 8, %s30
        %p394 = scmp.lt.s32.totalorder %s393, 7
        %s395 = scalar_select %p394, %s393, 7
        %s396 = smul.addr %s395, 8
        %s397 = scalar_lea.vmem %s0, %s396
        %p398 = pneg %p59
        %p399 = pneg %p56
        %p400 = pneg %p80
        %p401 = pneg %p77
        %p402 = pneg %p101
        %p403 = pneg %p98
        %s404 = sand.u32 %s114, 1
        %s405 = scalar_lea.sflag [#allocation4], %s404
        %s406 = sand.u32 %s114, 1
        %s407 = smul.addr %s406, 256
        %s408 = scalar_lea.vmem [#allocation3], %s407
        %p409 = pneg %p127
        %p410 = pneg %p124
        %p411 = scmp.lt.s32.totalorder %s31, 2
        %s412 = scalar_select %p411, %s31, 2
        %s413 = smul.addr %s412, 4
        %s414 = scalar_lea.vmem %s4, %s413
        %p415 = pneg %p153
        %p416 = pneg %p150
        %s417 = sand.u32 %s166, 1
        %s418 = scalar_lea.sflag [#allocation6], %s417
        %s419 = sand.u32 %s166, 1
        %s420 = smul.addr %s419, 256
        %s421 = scalar_lea.vmem [#allocation5], %s420
        %p422 = pneg %p179
        %p423 = pneg %p176
        %p424 = scmp.lt.s32.totalorder %s31, 2
        %s425 = scalar_select %p424, %s31, 2
        %s426 = scalar_lea.vmem %s6, %s425
        %p427 = pneg %p205
        %p428 = pneg %p202
        %p429 = pneg %p226
        %p430 = pneg %p223
        %p431 = pneg %p247
        %p432 = pneg %p244
        %p433 = pneg %p273
        %p434 = pneg %p270
        %s435 = smul.u32 8, %s30
        %p436 = scmp.lt.s32.totalorder %s435, 7
        %s437 = scalar_select %p436, %s435, 7
        %s438 = smul.addr %s437, 8
        %s439 = scalar_lea.vmem %s9, %s438
        %s440 = smul.u32 8, %s30
        %p441 = scmp.lt.s32.totalorder %s440, 7
        %s442 = scalar_select %p441, %s440, 7
        %s443 = smul.addr %s442, 8
        %s444 = scalar_lea.vmem %s0, %s443
        %s445 = smul.u32 8, %s30
        %p446 = scmp.lt.s32.totalorder %s31, 2
        %s447 = scalar_select %p446, %s31, 2
        %s448 = smul.addr %s447, 4
        %s449 = scalar_lea.vmem %s4, %s448
        %p450 = scmp.lt.s32.totalorder %s31, 2
        %s451 = scalar_select %p450, %s31, 2
        %s452 = scalar_lea.vmem %s6, %s451
        %s453 = smul.u32 8, %s30
        %p454 = scmp.lt.s32.totalorder %s453, 7
        %s455 = scalar_select %p454, %s453, 7
        %s456 = smul.addr %s455, 8
        %s457 = scalar_lea.vmem %s9, %s456
        %s458 = smul.u32 8, %s30
        %p460 = scmp.eq.s32.totalorder %s31, 0
        // Predicated region
        $region65: #{deepnet_forward.1} parent=55 // pred_check
          %p461 = pneg %p460
        $region66: #{deepnet_forward.1} parent=55 // pred_check_branch
          %463 = sbr.rel (%p461) target = $region68
        $region67: #{deepnet_forward.1} parent=55 // pred_region
          %v464 = vld [vmem:[%s444] sm:$0xff]
          %v465 = vld [vmem:[%s444 + $0x8] sm:$0xff]
          %v466 = vld [vmem:[%s444 + $0x10] sm:$0xff]
          %v467 = vld [vmem:[%s444 + $0x18] sm:$0xff]
          %v468 = vld [vmem:[%s444 + $0x20] sm:$0xff]
          %v469 = vld [vmem:[%s444 + $0x28] sm:$0xff]
          %v470 = vld [vmem:[%s444 + $0x30] sm:$0xff]
          %v471 = vld [vmem:[%s444 + $0x38] sm:$0xff]
          %v472 = vpack.c.bf16 %v465, %v464
          %v473 = vpack.c.bf16 %v467, %v466
          %v474 = vpack.c.bf16 %v469, %v468
          %v475 = vpack.c.bf16 %v471, %v470
          %v476 = vld [vmem:[%s1] sm:$0xf]
          %v477 = vld [vmem:[%s1 + $0x4] sm:$0xf]
          %v478 = vld [vmem:[%s2] sm:$0x1]
          %v480 = vlaneseq
          %v481 = vshrl.u32 %v480, 7
          %v482 = vsub.s32 0, %v481
          %v483 = vrot.slane %v478, %v482
          %v487 = vunpack.c.l.b16 %v476
          %v488 = vunpack.c.l.b16 %v477
          %v489 = vpack.c.b16 %v488, %v487
          %vm491 = vcmask 130048
          %v493 = vsel %vm491, %v472, 0
          %v496 = vsel %vm491, %v473, 0
          %v499 = vsel %vm491, %v474, 0
          %v502 = vsel %vm491, %v475, 0
          %504 = vmatprep.subr.bf16.mxu0 0
          %505 = vmatpush1.bf16.msra.mxu0 0
          %506 = vmatprep.subr.bf16.mxu0 0
          %507 = vmatpush1.bf16.msra.mxu0 0
          %508 = vmatprep.subr.bf16.mxu0 0
          %509 = vmatpush1.bf16.msra.mxu0 0
          %510 = vmatprep.subr.bf16.mxu0 0
          %511 = vmatpush1.bf16.msra.mxu0 0
          %512 = vmatprep.subr.bf16.mxu0 0
          %513 = vmatpush1.bf16.msra.mxu0 0
          %514 = vmatprep.subr.bf16.mxu0 0
          %515 = vmatpush1.bf16.msra.mxu0 0
          %516 = vmatprep.subr.bf16.mxu0 0
          %517 = vmatpush1.bf16.msra.mxu0 0
          %518 = vmatprep.subr.bf16.mxu0 0
          %519 = vmatpush1.bf16.msra.mxu0 %v489
          %520 = vmatprep.subr.bf16.mxu0 0
          %521 = vmatpush2.bf16.msra.mxu0 0
          %522 = vmatprep.subr.bf16.mxu0 0
          %523 = vmatpush2.bf16.msra.mxu0 0
          %524 = vmatprep.subr.bf16.mxu0 0
          %525 = vmatpush2.bf16.msra.mxu0 0
          %526 = vmatprep.subr.bf16.mxu0 0
          %527 = vmatpush2.bf16.msra.mxu0 0
          %528 = vmatprep.subr.bf16.mxu0 0
          %529 = vmatpush2.bf16.msra.mxu0 0
          %530 = vmatprep.subr.bf16.mxu0 0
          %531 = vmatpush2.bf16.msra.mxu0 0
          %532 = vmatprep.subr.bf16.mxu0 0
          %533 = vmatpush2.bf16.msra.mxu0 0
          %534 = vmatprep.subr.bf16.mxu0 0
          %535 = vmatpush2.bf16.msra.mxu0 0
          %536 = vmatprep.mubr.bf16.mxu0 0
          %537 = vmatmul.mubr.bf16.gmra.mxu0 %v493
          %v538 = vpop.f32.mrf.mxu0
          %v539 = vadd.f32 %v483, %v538
          %v540 = vpop.f32.mrf.mxu0
          %v541 = vpop.f32.mrf.mxu0
          %v542 = vadd.f32 %v483, %v541
          %v543 = vpop.f32.mrf.mxu0
          %544 = vmatprep.mubr.bf16.mxu0 0
          %545 = vmatmul.mubr.bf16.gmra.mxu0 %v496
          %v546 = vpop.f32.mrf.mxu0
          %v547 = vadd.f32 %v483, %v546
          %v548 = vpop.f32.mrf.mxu0
          %v549 = vpop.f32.mrf.mxu0
          %v550 = vadd.f32 %v483, %v549
          %v551 = vpop.f32.mrf.mxu0
          %552 = vmatprep.mubr.bf16.mxu0 0
          %553 = vmatmul.mubr.bf16.gmra.mxu0 %v499
          %v554 = vpop.f32.mrf.mxu0
          %v555 = vadd.f32 %v483, %v554
          %v556 = vpop.f32.mrf.mxu0
          %v557 = vpop.f32.mrf.mxu0
          %v558 = vadd.f32 %v483, %v557
          %v559 = vpop.f32.mrf.mxu0
          %560 = vmatprep.mubr.bf16.mxu0 0
          %561 = vmatmul.mubr.bf16.gmra.mxu0 %v502
          %v562 = vpop.f32.mrf.mxu0
          %v563 = vadd.f32 %v483, %v562
          %v564 = vpop.f32.mrf.mxu0
          %v565 = vpop.f32.mrf.mxu0
          %v566 = vadd.f32 %v483, %v565
          %v567 = vpop.f32.mrf.mxu0
          %568 = vdwg.mxu0
          %569 = vst [vmem:[#allocation2] sm:$0xff] %v539
          %570 = vst [vmem:[#allocation2 + $0x8] sm:$0xff] %v542
          %571 = vst [vmem:[#allocation2 + $0x10] sm:$0xff] %v547
          %572 = vst [vmem:[#allocation2 + $0x18] sm:$0xff] %v550
          %573 = vst [vmem:[#allocation2 + $0x20] sm:$0xff] %v555
          %574 = vst [vmem:[#allocation2 + $0x28] sm:$0xff] %v558
          %575 = vst [vmem:[#allocation2 + $0x30] sm:$0xff] %v563
          %576 = vst [vmem:[#allocation2 + $0x38] sm:$0xff] %v566
        $region68: #{deepnet_forward.1} parent=55 // pred_fallthru
          _
        %v577 = vld [vmem:[#allocation2] sm:$0xff]
        %v578 = vld [vmem:[#allocation2 + $0x8] sm:$0xff]
        %v579 = vld [vmem:[#allocation2 + $0x10] sm:$0xff]
        %v580 = vld [vmem:[#allocation2 + $0x18] sm:$0xff]
        %v581 = vld [vmem:[#allocation2 + $0x20] sm:$0xff]
        %v582 = vld [vmem:[#allocation2 + $0x28] sm:$0xff]
        %v583 = vld [vmem:[#allocation2 + $0x30] sm:$0xff]
        %v584 = vld [vmem:[#allocation2 + $0x38] sm:$0xff]
        %v585 = vpack.c.bf16 %v578, %v577
        %v586 = vpack.c.bf16 %v580, %v579
        %v587 = vpack.c.bf16 %v582, %v581
        %v588 = vpack.c.bf16 %v584, %v583
        %v589 = vld [vmem:[%s379] sm:$0xff]
        %v590 = vld [vmem:[%s379 + $0x8] sm:$0xff]
        %v591 = vld [vmem:[%s379 + $0x10] sm:$0xff]
        %v592 = vld [vmem:[%s379 + $0x18] sm:$0xff]
        %v593 = vld [vmem:[%s379 + $0x20] sm:$0xff]
        %v594 = vld [vmem:[%s379 + $0x28] sm:$0xff]
        %v595 = vld [vmem:[%s379 + $0x30] sm:$0xff]
        %v596 = vld [vmem:[%s379 + $0x38] sm:$0xff]
        %v597 = vld [vmem:[%s379 + $0x40] sm:$0xff]
        %v598 = vld [vmem:[%s379 + $0x48] sm:$0xff]
        %v599 = vld [vmem:[%s379 + $0x50] sm:$0xff]
        %v600 = vld [vmem:[%s379 + $0x58] sm:$0xff]
        %v601 = vld [vmem:[%s379 + $0x60] sm:$0xff]
        %v602 = vld [vmem:[%s379 + $0x68] sm:$0xff]
        %v603 = vld [vmem:[%s379 + $0x70] sm:$0xff]
        %v604 = vld [vmem:[%s379 + $0x78] sm:$0xff]
        %v605 = vld [vmem:[%s379 + $0x80] sm:$0xff]
        %v606 = vld [vmem:[%s379 + $0x88] sm:$0xff]
        %v607 = vld [vmem:[%s379 + $0x90] sm:$0xff]
        %v608 = vld [vmem:[%s379 + $0x98] sm:$0xff]
        %v609 = vld [vmem:[%s379 + $0xa0] sm:$0xff]
        %v610 = vld [vmem:[%s379 + $0xa8] sm:$0xff]
        %v611 = vld [vmem:[%s379 + $0xb0] sm:$0xff]
        %v612 = vld [vmem:[%s379 + $0xb8] sm:$0xff]
        %v613 = vld [vmem:[%s379 + $0xc0] sm:$0xff]
        %v614 = vld [vmem:[%s379 + $0xc8] sm:$0xff]
        %v615 = vld [vmem:[%s379 + $0xd0] sm:$0xff]
        %v616 = vld [vmem:[%s379 + $0xd8] sm:$0xff]
        %v617 = vld [vmem:[%s379 + $0xe0] sm:$0xff]
        %v618 = vld [vmem:[%s379 + $0xe8] sm:$0xff]
        %v619 = vld [vmem:[%s379 + $0xf0] sm:$0xff]
        %v620 = vld [vmem:[%s379 + $0xf8] sm:$0xff]
        %v621 = vld [vmem:[%s449] sm:$0xf]
        %v623 = vlaneseq
        %v624 = vshrl.u32 %v623, 7
        %v625 = vsub.s32 0, %v624
        %v626 = vrot.slane %v621, %v625
        %v627 = vlaneseq
        %v628 = vshrl.u32 %v627, 7
        %v629 = vsub.s32 1, %v628
        %v630 = vrot.slane %v621, %v629
        %v631 = vlaneseq
        %v632 = vshrl.u32 %v631, 7
        %v633 = vsub.s32 2, %v632
        %v634 = vrot.slane %v621, %v633
        %v635 = vlaneseq
        %v636 = vshrl.u32 %v635, 7
        %v637 = vsub.s32 3, %v636
        %v638 = vrot.slane %v621, %v637
        %v675 = vunpack.c.l.b16 %v589
        %v676 = vunpack.c.h.b16 %v589
        %v677 = vunpack.c.l.b16 %v590
        %v678 = vunpack.c.h.b16 %v590
        %v679 = vunpack.c.l.b16 %v591
        %v680 = vunpack.c.h.b16 %v591
        %v681 = vunpack.c.l.b16 %v592
        %v682 = vunpack.c.h.b16 %v592
        %v683 = vunpack.c.l.b16 %v593
        %v684 = vunpack.c.h.b16 %v593
        %v685 = vunpack.c.l.b16 %v594
        %v686 = vunpack.c.h.b16 %v594
        %v687 = vunpack.c.l.b16 %v595
        %v688 = vunpack.c.h.b16 %v595
        %v689 = vunpack.c.l.b16 %v596
        %v690 = vunpack.c.h.b16 %v596
        %v691 = vunpack.c.l.b16 %v597
        %v692 = vunpack.c.h.b16 %v597
        %v693 = vunpack.c.l.b16 %v598
        %v694 = vunpack.c.h.b16 %v598
        %v695 = vunpack.c.l.b16 %v599
        %v696 = vunpack.c.h.b16 %v599
        %v697 = vunpack.c.l.b16 %v600
        %v698 = vunpack.c.h.b16 %v600
        %v699 = vunpack.c.l.b16 %v601
        %v700 = vunpack.c.h.b16 %v601
        %v701 = vunpack.c.l.b16 %v602
        %v702 = vunpack.c.h.b16 %v602
        %v703 = vunpack.c.l.b16 %v603
        %v704 = vunpack.c.h.b16 %v603
        %v705 = vunpack.c.l.b16 %v604
        %v706 = vunpack.c.h.b16 %v604
        %v707 = vunpack.c.l.b16 %v605
        %v708 = vunpack.c.h.b16 %v605
        %v709 = vunpack.c.l.b16 %v606
        %v710 = vunpack.c.h.b16 %v606
        %v711 = vunpack.c.l.b16 %v607
        %v712 = vunpack.c.h.b16 %v607
        %v713 = vunpack.c.l.b16 %v608
        %v714 = vunpack.c.h.b16 %v608
        %v715 = vunpack.c.l.b16 %v609
        %v716 = vunpack.c.h.b16 %v609
        %v717 = vunpack.c.l.b16 %v610
        %v718 = vunpack.c.h.b16 %v610
        %v719 = vunpack.c.l.b16 %v611
        %v720 = vunpack.c.h.b16 %v611
        %v721 = vunpack.c.l.b16 %v612
        %v722 = vunpack.c.h.b16 %v612
        %v723 = vunpack.c.l.b16 %v613
        %v724 = vunpack.c.h.b16 %v613
        %v725 = vunpack.c.l.b16 %v614
        %v726 = vunpack.c.h.b16 %v614
        %v727 = vunpack.c.l.b16 %v615
        %v728 = vunpack.c.h.b16 %v615
        %v729 = vunpack.c.l.b16 %v616
        %v730 = vunpack.c.h.b16 %v616
        %v731 = vunpack.c.l.b16 %v617
        %v732 = vunpack.c.h.b16 %v617
        %v733 = vunpack.c.l.b16 %v618
        %v734 = vunpack.c.h.b16 %v618
        %v735 = vunpack.c.l.b16 %v619
        %v736 = vunpack.c.h.b16 %v619
        %v737 = vunpack.c.l.b16 %v620
        %v738 = vunpack.c.h.b16 %v620
        %v739 = vpack.c.b16 %v679, %v675
        %v740 = vpack.c.b16 %v680, %v676
        %v741 = vpack.c.b16 %v681, %v677
        %v742 = vpack.c.b16 %v682, %v678
        %v743 = vpack.c.b16 %v687, %v683
        %v744 = vpack.c.b16 %v688, %v684
        %v745 = vpack.c.b16 %v689, %v685
        %v746 = vpack.c.b16 %v690, %v686
        %v747 = vpack.c.b16 %v695, %v691
        %v748 = vpack.c.b16 %v696, %v692
        %v749 = vpack.c.b16 %v697, %v693
        %v750 = vpack.c.b16 %v698, %v694
        %v751 = vpack.c.b16 %v703, %v699
        %v752 = vpack.c.b16 %v704, %v700
        %v753 = vpack.c.b16 %v705, %v701
        %v754 = vpack.c.b16 %v706, %v702
        %v755 = vpack.c.b16 %v711, %v707
        %v756 = vpack.c.b16 %v712, %v708
        %v757 = vpack.c.b16 %v713, %v709
        %v758 = vpack.c.b16 %v714, %v710
        %v759 = vpack.c.b16 %v719, %v715
        %v760 = vpack.c.b16 %v720, %v716
        %v761 = vpack.c.b16 %v721, %v717
        %v762 = vpack.c.b16 %v722, %v718
        %v763 = vpack.c.b16 %v727, %v723
        %v764 = vpack.c.b16 %v728, %v724
        %v765 = vpack.c.b16 %v729, %v725
        %v766 = vpack.c.b16 %v730, %v726
        %v767 = vpack.c.b16 %v735, %v731
        %v768 = vpack.c.b16 %v736, %v732
        %v769 = vpack.c.b16 %v737, %v733
        %v770 = vpack.c.b16 %v738, %v734
        %803 = vmatprep.subr.bf16.mxu0 %v768
        %804 = vmatpush1.bf16.msra.mxu0 %v767
        %805 = vmatprep.subr.bf16.mxu0 %v764
        %806 = vmatpush1.bf16.msra.mxu0 %v763
        %807 = vmatprep.subr.bf16.mxu0 %v760
        %808 = vmatpush1.bf16.msra.mxu0 %v759
        %809 = vmatprep.subr.bf16.mxu0 %v756
        %810 = vmatpush1.bf16.msra.mxu0 %v755
        %811 = vmatprep.subr.bf16.mxu0 %v752
        %812 = vmatpush1.bf16.msra.mxu0 %v751
        %813 = vmatprep.subr.bf16.mxu0 %v748
        %814 = vmatpush1.bf16.msra.mxu0 %v747
        %815 = vmatprep.subr.bf16.mxu0 %v744
        %816 = vmatpush1.bf16.msra.mxu0 %v743
        %817 = vmatprep.subr.bf16.mxu0 %v740
        %818 = vmatpush1.bf16.msra.mxu0 %v739
        %819 = vmatprep.subr.bf16.mxu0 0
        %820 = vmatpush2.bf16.msra.mxu0 0
        %821 = vmatprep.subr.bf16.mxu0 0
        %822 = vmatpush2.bf16.msra.mxu0 0
        %823 = vmatprep.subr.bf16.mxu0 0
        %824 = vmatpush2.bf16.msra.mxu0 0
        %825 = vmatprep.subr.bf16.mxu0 0
        %826 = vmatpush2.bf16.msra.mxu0 0
        %827 = vmatprep.subr.bf16.mxu0 0
        %828 = vmatpush2.bf16.msra.mxu0 0
        %829 = vmatprep.subr.bf16.mxu0 0
        %830 = vmatpush2.bf16.msra.mxu0 0
        %831 = vmatprep.subr.bf16.mxu0 0
        %832 = vmatpush2.bf16.msra.mxu0 0
        %833 = vmatprep.subr.bf16.mxu0 0
        %834 = vmatpush2.bf16.msra.mxu0 0
        %835 = vmatprep.mubr.bf16.mxu0 0
        %836 = vmatmul.mubr.bf16.gmra.mxu0 %v585
        %v837 = vpop.f32.mrf.mxu0
        %v838 = vadd.f32 %v626, %v837
        %v839 = vpop.f32.mrf.mxu0
        %v840 = vadd.f32 %v630, %v839
        %v841 = vpop.f32.mrf.mxu0
        %v842 = vadd.f32 %v626, %v841
        %v843 = vpop.f32.mrf.mxu0
        %v844 = vadd.f32 %v630, %v843
        %845 = vmatprep.mubr.bf16.mxu0 0
        %846 = vmatmul.mubr.bf16.gmra.mxu0 %v586
        %v847 = vpop.f32.mrf.mxu0
        %v848 = vadd.f32 %v626, %v847
        %v849 = vpop.f32.mrf.mxu0
        %v850 = vadd.f32 %v630, %v849
        %v851 = vpop.f32.mrf.mxu0
        %v852 = vadd.f32 %v626, %v851
        %v853 = vpop.f32.mrf.mxu0
        %v854 = vadd.f32 %v630, %v853
        %855 = vmatprep.mubr.bf16.mxu0 0
        %856 = vmatmul.mubr.bf16.gmra.mxu0 %v587
        %v857 = vpop.f32.mrf.mxu0
        %v858 = vadd.f32 %v626, %v857
        %v859 = vpop.f32.mrf.mxu0
        %v860 = vadd.f32 %v630, %v859
        %v861 = vpop.f32.mrf.mxu0
        %v862 = vadd.f32 %v626, %v861
        %v863 = vpop.f32.mrf.mxu0
        %v864 = vadd.f32 %v630, %v863
        %865 = vmatprep.mubr.bf16.mxu0 0
        %866 = vmatmul.mubr.bf16.gmra.mxu0 %v588
        %v867 = vpop.f32.mrf.mxu0
        %v868 = vadd.f32 %v626, %v867
        %v869 = vpop.f32.mrf.mxu0
        %v870 = vadd.f32 %v630, %v869
        %v871 = vpop.f32.mrf.mxu0
        %v872 = vadd.f32 %v626, %v871
        %v873 = vpop.f32.mrf.mxu0
        %v874 = vadd.f32 %v630, %v873
        %875 = vdwg.mxu0
        %876 = vmatprep.subr.bf16.mxu0 %v770
        %877 = vmatpush1.bf16.msra.mxu0 %v769
        %878 = vmatprep.subr.bf16.mxu0 %v766
        %879 = vmatpush1.bf16.msra.mxu0 %v765
        %880 = vmatprep.subr.bf16.mxu0 %v762
        %881 = vmatpush1.bf16.msra.mxu0 %v761
        %882 = vmatprep.subr.bf16.mxu0 %v758
        %883 = vmatpush1.bf16.msra.mxu0 %v757
        %884 = vmatprep.subr.bf16.mxu0 %v754
        %885 = vmatpush1.bf16.msra.mxu0 %v753
        %886 = vmatprep.subr.bf16.mxu0 %v750
        %887 = vmatpush1.bf16.msra.mxu0 %v749
        %888 = vmatprep.subr.bf16.mxu0 %v746
        %889 = vmatpush1.bf16.msra.mxu0 %v745
        %890 = vmatprep.subr.bf16.mxu0 %v742
        %891 = vmatpush1.bf16.msra.mxu0 %v741
        %892 = vmatprep.subr.bf16.mxu0 0
        %893 = vmatpush2.bf16.msra.mxu0 0
        %894 = vmatprep.subr.bf16.mxu0 0
        %895 = vmatpush2.bf16.msra.mxu0 0
        %896 = vmatprep.subr.bf16.mxu0 0
        %897 = vmatpush2.bf16.msra.mxu0 0
        %898 = vmatprep.subr.bf16.mxu0 0
        %899 = vmatpush2.bf16.msra.mxu0 0
        %900 = vmatprep.subr.bf16.mxu0 0
        %901 = vmatpush2.bf16.msra.mxu0 0
        %902 = vmatprep.subr.bf16.mxu0 0
        %903 = vmatpush2.bf16.msra.mxu0 0
        %904 = vmatprep.subr.bf16.mxu0 0
        %905 = vmatpush2.bf16.msra.mxu0 0
        %906 = vmatprep.subr.bf16.mxu0 0
        %907 = vmatpush2.bf16.msra.mxu0 0
        %908 = vmatprep.mubr.bf16.mxu0 0
        %909 = vmatmul.mubr.bf16.gmra.mxu0 %v585
        %v910 = vpop.f32.mrf.mxu0
        %v911 = vadd.f32 %v634, %v910
        %v912 = vpop.f32.mrf.mxu0
        %v913 = vadd.f32 %v638, %v912
        %v914 = vpop.f32.mrf.mxu0
        %v915 = vadd.f32 %v634, %v914
        %v916 = vpop.f32.mrf.mxu0
        %v917 = vadd.f32 %v638, %v916
        %918 = vmatprep.mubr.bf16.mxu0 0
        %919 = vmatmul.mubr.bf16.gmra.mxu0 %v586
        %v920 = vpop.f32.mrf.mxu0
        %v921 = vadd.f32 %v634, %v920
        %v922 = vpop.f32.mrf.mxu0
        %v923 = vadd.f32 %v638, %v922
        %v924 = vpop.f32.mrf.mxu0
        %v925 = vadd.f32 %v634, %v924
        %v926 = vpop.f32.mrf.mxu0
        %v927 = vadd.f32 %v638, %v926
        %928 = vmatprep.mubr.bf16.mxu0 0
        %929 = vmatmul.mubr.bf16.gmra.mxu0 %v587
        %v930 = vpop.f32.mrf.mxu0
        %v931 = vadd.f32 %v634, %v930
        %v932 = vpop.f32.mrf.mxu0
        %v933 = vadd.f32 %v638, %v932
        %v934 = vpop.f32.mrf.mxu0
        %v935 = vadd.f32 %v634, %v934
        %v936 = vpop.f32.mrf.mxu0
        %v937 = vadd.f32 %v638, %v936
        %938 = vmatprep.mubr.bf16.mxu0 0
        %939 = vmatmul.mubr.bf16.gmra.mxu0 %v588
        %v940 = vpop.f32.mrf.mxu0
        %v941 = vadd.f32 %v634, %v940
        %v942 = vpop.f32.mrf.mxu0
        %v943 = vadd.f32 %v638, %v942
        %v944 = vpop.f32.mrf.mxu0
        %v945 = vadd.f32 %v634, %v944
        %v946 = vpop.f32.mrf.mxu0
        %v947 = vadd.f32 %v638, %v946
        %948 = vdwg.mxu0
        %v949 = vmax.f32 %v838, 0.0
        %v950 = vmax.f32 %v840, 0.0
        %v951 = vmax.f32 %v911, 0.0
        %v952 = vmax.f32 %v913, 0.0
        %v953 = vmax.f32 %v842, 0.0
        %v954 = vmax.f32 %v844, 0.0
        %v955 = vmax.f32 %v915, 0.0
        %v956 = vmax.f32 %v917, 0.0
        %v957 = vmax.f32 %v848, 0.0
        %v958 = vmax.f32 %v850, 0.0
        %v959 = vmax.f32 %v921, 0.0
        %v960 = vmax.f32 %v923, 0.0
        %v961 = vmax.f32 %v852, 0.0
        %v962 = vmax.f32 %v854, 0.0
        %v963 = vmax.f32 %v925, 0.0
        %v964 = vmax.f32 %v927, 0.0
        %v965 = vmax.f32 %v858, 0.0
        %v966 = vmax.f32 %v860, 0.0
        %v967 = vmax.f32 %v931, 0.0
        %v968 = vmax.f32 %v933, 0.0
        %v969 = vmax.f32 %v862, 0.0
        %v970 = vmax.f32 %v864, 0.0
        %v971 = vmax.f32 %v935, 0.0
        %v972 = vmax.f32 %v937, 0.0
        %v973 = vmax.f32 %v868, 0.0
        %v974 = vmax.f32 %v870, 0.0
        %v975 = vmax.f32 %v941, 0.0
        %v976 = vmax.f32 %v943, 0.0
        %v977 = vmax.f32 %v872, 0.0
        %v978 = vmax.f32 %v874, 0.0
        %v979 = vmax.f32 %v945, 0.0
        %v980 = vmax.f32 %v947, 0.0
        %v981 = vpack.c.bf16 %v953, %v949
        %v982 = vpack.c.bf16 %v954, %v950
        %v983 = vpack.c.bf16 %v955, %v951
        %v984 = vpack.c.bf16 %v956, %v952
        %v985 = vpack.c.bf16 %v961, %v957
        %v986 = vpack.c.bf16 %v962, %v958
        %v987 = vpack.c.bf16 %v963, %v959
        %v988 = vpack.c.bf16 %v964, %v960
        %v989 = vpack.c.bf16 %v969, %v965
        %v990 = vpack.c.bf16 %v970, %v966
        %v991 = vpack.c.bf16 %v971, %v967
        %v992 = vpack.c.bf16 %v972, %v968
        %v993 = vpack.c.bf16 %v977, %v973
        %v994 = vpack.c.bf16 %v978, %v974
        %v995 = vpack.c.bf16 %v979, %v975
        %v996 = vpack.c.bf16 %v980, %v976
        %v997 = vld [vmem:[%s388] sm:$0xf]
        %v998 = vld [vmem:[%s388 + $0x4] sm:$0xf]
        %v999 = vld [vmem:[%s388 + $0x8] sm:$0xf]
        %v1000 = vld [vmem:[%s388 + $0xc] sm:$0xf]
        %v1001 = vld [vmem:[%s388 + $0x10] sm:$0xf]
        %v1002 = vld [vmem:[%s388 + $0x14] sm:$0xf]
        %v1003 = vld [vmem:[%s388 + $0x18] sm:$0xf]
        %v1004 = vld [vmem:[%s388 + $0x1c] sm:$0xf]
        %v1005 = vld [vmem:[%s388 + $0x20] sm:$0xf]
        %v1006 = vld [vmem:[%s388 + $0x24] sm:$0xf]
        %v1007 = vld [vmem:[%s388 + $0x28] sm:$0xf]
        %v1008 = vld [vmem:[%s388 + $0x2c] sm:$0xf]
        %v1009 = vld [vmem:[%s388 + $0x30] sm:$0xf]
        %v1010 = vld [vmem:[%s388 + $0x34] sm:$0xf]
        %v1011 = vld [vmem:[%s388 + $0x38] sm:$0xf]
        %v1012 = vld [vmem:[%s388 + $0x3c] sm:$0xf]
        %v1013 = vld [vmem:[%s388 + $0x40] sm:$0xf]
        %v1014 = vld [vmem:[%s388 + $0x44] sm:$0xf]
        %v1015 = vld [vmem:[%s388 + $0x48] sm:$0xf]
        %v1016 = vld [vmem:[%s388 + $0x4c] sm:$0xf]
        %v1017 = vld [vmem:[%s388 + $0x50] sm:$0xf]
        %v1018 = vld [vmem:[%s388 + $0x54] sm:$0xf]
        %v1019 = vld [vmem:[%s388 + $0x58] sm:$0xf]
        %v1020 = vld [vmem:[%s388 + $0x5c] sm:$0xf]
        %v1021 = vld [vmem:[%s388 + $0x60] sm:$0xf]
        %v1022 = vld [vmem:[%s388 + $0x64] sm:$0xf]
        %v1023 = vld [vmem:[%s388 + $0x68] sm:$0xf]
        %v1024 = vld [vmem:[%s388 + $0x6c] sm:$0xf]
        %v1025 = vld [vmem:[%s388 + $0x70] sm:$0xf]
        %v1026 = vld [vmem:[%s388 + $0x74] sm:$0xf]
        %v1027 = vld [vmem:[%s388 + $0x78] sm:$0xf]
        %v1028 = vld [vmem:[%s388 + $0x7c] sm:$0xf]
        %v1029 = vld [vmem:[%s388 + $0x80] sm:$0xf]
        %v1030 = vld [vmem:[%s388 + $0x84] sm:$0xf]
        %v1031 = vld [vmem:[%s388 + $0x88] sm:$0xf]
        %v1032 = vld [vmem:[%s388 + $0x8c] sm:$0xf]
        %v1033 = vld [vmem:[%s388 + $0x90] sm:$0xf]
        %v1034 = vld [vmem:[%s388 + $0x94] sm:$0xf]
        %v1035 = vld [vmem:[%s388 + $0x98] sm:$0xf]
        %v1036 = vld [vmem:[%s388 + $0x9c] sm:$0xf]
        %v1037 = vld [vmem:[%s388 + $0xa0] sm:$0xf]
        %v1038 = vld [vmem:[%s388 + $0xa4] sm:$0xf]
        %v1039 = vld [vmem:[%s388 + $0xa8] sm:$0xf]
        %v1040 = vld [vmem:[%s388 + $0xac] sm:$0xf]
        %v1041 = vld [vmem:[%s388 + $0xb0] sm:$0xf]
        %v1042 = vld [vmem:[%s388 + $0xb4] sm:$0xf]
        %v1043 = vld [vmem:[%s388 + $0xb8] sm:$0xf]
        %v1044 = vld [vmem:[%s388 + $0xbc] sm:$0xf]
        %v1045 = vld [vmem:[%s388 + $0xc0] sm:$0xf]
        %v1046 = vld [vmem:[%s388 + $0xc4] sm:$0xf]
        %v1047 = vld [vmem:[%s388 + $0xc8] sm:$0xf]
        %v1048 = vld [vmem:[%s388 + $0xcc] sm:$0xf]
        %v1049 = vld [vmem:[%s388 + $0xd0] sm:$0xf]
        %v1050 = vld [vmem:[%s388 + $0xd4] sm:$0xf]
        %v1051 = vld [vmem:[%s388 + $0xd8] sm:$0xf]
        %v1052 = vld [vmem:[%s388 + $0xdc] sm:$0xf]
        %v1053 = vld [vmem:[%s388 + $0xe0] sm:$0xf]
        %v1054 = vld [vmem:[%s388 + $0xe4] sm:$0xf]
        %v1055 = vld [vmem:[%s388 + $0xe8] sm:$0xf]
        %v1056 = vld [vmem:[%s388 + $0xec] sm:$0xf]
        %v1057 = vld [vmem:[%s388 + $0xf0] sm:$0xf]
        %v1058 = vld [vmem:[%s388 + $0xf4] sm:$0xf]
        %v1059 = vld [vmem:[%s388 + $0xf8] sm:$0xf]
        %v1060 = vld [vmem:[%s388 + $0xfc] sm:$0xf]
        %v1061 = vld [vmem:[%s452] sm:$0x1]
        %v1063 = vlaneseq
        %v1064 = vshrl.u32 %v1063, 7
        %v1065 = vsub.s32 0, %v1064
        %v1066 = vrot.slane %v1061, %v1065
        %v1132 = vunpack.c.l.b16 %v997
        %v1133 = vunpack.c.l.b16 %v998
        %v1134 = vunpack.c.l.b16 %v999
        %v1135 = vunpack.c.l.b16 %v1000
        %v1136 = vunpack.c.l.b16 %v1001
        %v1137 = vunpack.c.l.b16 %v1002
        %v1138 = vunpack.c.l.b16 %v1003
        %v1139 = vunpack.c.l.b16 %v1004
        %v1140 = vunpack.c.l.b16 %v1005
        %v1141 = vunpack.c.l.b16 %v1006
        %v1142 = vunpack.c.l.b16 %v1007
        %v1143 = vunpack.c.l.b16 %v1008
        %v1144 = vunpack.c.l.b16 %v1009
        %v1145 = vunpack.c.l.b16 %v1010
        %v1146 = vunpack.c.l.b16 %v1011
        %v1147 = vunpack.c.l.b16 %v1012
        %v1148 = vunpack.c.l.b16 %v1013
        %v1149 = vunpack.c.l.b16 %v1014
        %v1150 = vunpack.c.l.b16 %v1015
        %v1151 = vunpack.c.l.b16 %v1016
        %v1152 = vunpack.c.l.b16 %v1017
        %v1153 = vunpack.c.l.b16 %v1018
        %v1154 = vunpack.c.l.b16 %v1019
        %v1155 = vunpack.c.l.b16 %v1020
        %v1156 = vunpack.c.l.b16 %v1021
        %v1157 = vunpack.c.l.b16 %v1022
        %v1158 = vunpack.c.l.b16 %v1023
        %v1159 = vunpack.c.l.b16 %v1024
        %v1160 = vunpack.c.l.b16 %v1025
        %v1161 = vunpack.c.l.b16 %v1026
        %v1162 = vunpack.c.l.b16 %v1027
        %v1163 = vunpack.c.l.b16 %v1028
        %v1164 = vunpack.c.l.b16 %v1029
        %v1165 = vunpack.c.l.b16 %v1030
        %v1166 = vunpack.c.l.b16 %v1031
        %v1167 = vunpack.c.l.b16 %v1032
        %v1168 = vunpack.c.l.b16 %v1033
        %v1169 = vunpack.c.l.b16 %v1034
        %v1170 = vunpack.c.l.b16 %v1035
        %v1171 = vunpack.c.l.b16 %v1036
        %v1172 = vunpack.c.l.b16 %v1037
        %v1173 = vunpack.c.l.b16 %v1038
        %v1174 = vunpack.c.l.b16 %v1039
        %v1175 = vunpack.c.l.b16 %v1040
        %v1176 = vunpack.c.l.b16 %v1041
        %v1177 = vunpack.c.l.b16 %v1042
        %v1178 = vunpack.c.l.b16 %v1043
        %v1179 = vunpack.c.l.b16 %v1044
        %v1180 = vunpack.c.l.b16 %v1045
        %v1181 = vunpack.c.l.b16 %v1046
        %v1182 = vunpack.c.l.b16 %v1047
        %v1183 = vunpack.c.l.b16 %v1048
        %v1184 = vunpack.c.l.b16 %v1049
        %v1185 = vunpack.c.l.b16 %v1050
        %v1186 = vunpack.c.l.b16 %v1051
        %v1187 = vunpack.c.l.b16 %v1052
        %v1188 = vunpack.c.l.b16 %v1053
        %v1189 = vunpack.c.l.b16 %v1054
        %v1190 = vunpack.c.l.b16 %v1055
        %v1191 = vunpack.c.l.b16 %v1056
        %v1192 = vunpack.c.l.b16 %v1057
        %v1193 = vunpack.c.l.b16 %v1058
        %v1194 = vunpack.c.l.b16 %v1059
        %v1195 = vunpack.c.l.b16 %v1060
        %v1196 = vpack.c.b16 %v1133, %v1132
        %v1197 = vpack.c.b16 %v1135, %v1134
        %v1198 = vpack.c.b16 %v1137, %v1136
        %v1199 = vpack.c.b16 %v1139, %v1138
        %v1200 = vpack.c.b16 %v1141, %v1140
        %v1201 = vpack.c.b16 %v1143, %v1142
        %v1202 = vpack.c.b16 %v1145, %v1144
        %v1203 = vpack.c.b16 %v1147, %v1146
        %v1204 = vpack.c.b16 %v1149, %v1148
        %v1205 = vpack.c.b16 %v1151, %v1150
        %v1206 = vpack.c.b16 %v1153, %v1152
        %v1207 = vpack.c.b16 %v1155, %v1154
        %v1208 = vpack.c.b16 %v1157, %v1156
        %v1209 = vpack.c.b16 %v1159, %v1158
        %v1210 = vpack.c.b16 %v1161, %v1160
        %v1211 = vpack.c.b16 %v1163, %v1162
        %v1212 = vpack.c.b16 %v1165, %v1164
        %v1213 = vpack.c.b16 %v1167, %v1166
        %v1214 = vpack.c.b16 %v1169, %v1168
        %v1215 = vpack.c.b16 %v1171, %v1170
        %v1216 = vpack.c.b16 %v1173, %v1172
        %v1217 = vpack.c.b16 %v1175, %v1174
        %v1218 = vpack.c.b16 %v1177, %v1176
        %v1219 = vpack.c.b16 %v1179, %v1178
        %v1220 = vpack.c.b16 %v1181, %v1180
        %v1221 = vpack.c.b16 %v1183, %v1182
        %v1222 = vpack.c.b16 %v1185, %v1184
        %v1223 = vpack.c.b16 %v1187, %v1186
        %v1224 = vpack.c.b16 %v1189, %v1188
        %v1225 = vpack.c.b16 %v1191, %v1190
        %v1226 = vpack.c.b16 %v1193, %v1192
        %v1227 = vpack.c.b16 %v1195, %v1194
        %1260 = vmatprep.subr.bf16.mxu0 0
        %1261 = vmatpush1.bf16.msra.mxu0 %v1203
        %1262 = vmatprep.subr.bf16.mxu0 0
        %1263 = vmatpush1.bf16.msra.mxu0 %v1202
        %1264 = vmatprep.subr.bf16.mxu0 0
        %1265 = vmatpush1.bf16.msra.mxu0 %v1201
        %1266 = vmatprep.subr.bf16.mxu0 0
        %1267 = vmatpush1.bf16.msra.mxu0 %v1200
        %1268 = vmatprep.subr.bf16.mxu0 0
        %1269 = vmatpush1.bf16.msra.mxu0 %v1199
        %1270 = vmatprep.subr.bf16.mxu0 0
        %1271 = vmatpush1.bf16.msra.mxu0 %v1198
        %1272 = vmatprep.subr.bf16.mxu0 0
        %1273 = vmatpush1.bf16.msra.mxu0 %v1197
        %1274 = vmatprep.subr.bf16.mxu0 0
        %1275 = vmatpush1.bf16.msra.mxu0 %v1196
        %1276 = vmatprep.subr.bf16.mxu0 0
        %1277 = vmatpush2.bf16.msra.mxu0 %v1211
        %1278 = vmatprep.subr.bf16.mxu0 0
        %1279 = vmatpush2.bf16.msra.mxu0 %v1210
        %1280 = vmatprep.subr.bf16.mxu0 0
        %1281 = vmatpush2.bf16.msra.mxu0 %v1209
        %1282 = vmatprep.subr.bf16.mxu0 0
        %1283 = vmatpush2.bf16.msra.mxu0 %v1208
        %1284 = vmatprep.subr.bf16.mxu0 0
        %1285 = vmatpush2.bf16.msra.mxu0 %v1207
        %1286 = vmatprep.subr.bf16.mxu0 0
        %1287 = vmatpush2.bf16.msra.mxu0 %v1206
        %1288 = vmatprep.subr.bf16.mxu0 0
        %1289 = vmatpush2.bf16.msra.mxu0 %v1205
        %1290 = vmatprep.subr.bf16.mxu0 0
        %1291 = vmatpush2.bf16.msra.mxu0 %v1204
        %1292 = vmatprep.mubr.bf16.mxu0 %v982
        %1293 = vmatmul.mubr.bf16.gmra.mxu0 %v981
        %v1294 = vpop.f32.mrf.mxu0
        %v1295 = vadd.f32 %v1066, %v1294
        %v1296 = vpop.f32.mrf.mxu0
        %v1297 = vpop.f32.mrf.mxu0
        %v1298 = vadd.f32 %v1066, %v1297
        %v1299 = vpop.f32.mrf.mxu0
        %1300 = vmatprep.mubr.bf16.mxu0 %v986
        %1301 = vmatmul.mubr.bf16.gmra.mxu0 %v985
        %v1302 = vpop.f32.mrf.mxu0
        %v1303 = vadd.f32 %v1066, %v1302
        %v1304 = vpop.f32.mrf.mxu0
        %v1305 = vpop.f32.mrf.mxu0
        %v1306 = vadd.f32 %v1066, %v1305
        %v1307 = vpop.f32.mrf.mxu0
        %1308 = vmatprep.mubr.bf16.mxu0 %v990
        %1309 = vmatmul.mubr.bf16.gmra.mxu0 %v989
        %v1310 = vpop.f32.mrf.mxu0
        %v1311 = vadd.f32 %v1066, %v1310
        %v1312 = vpop.f32.mrf.mxu0
        %v1313 = vpop.f32.mrf.mxu0
        %v1314 = vadd.f32 %v1066, %v1313
        %v1315 = vpop.f32.mrf.mxu0
        %1316 = vmatprep.mubr.bf16.mxu0 %v994
        %1317 = vmatmul.mubr.bf16.gmra.mxu0 %v993
        %v1318 = vpop.f32.mrf.mxu0
        %v1319 = vadd.f32 %v1066, %v1318
        %v1320 = vpop.f32.mrf.mxu0
        %v1321 = vpop.f32.mrf.mxu0
        %v1322 = vadd.f32 %v1066, %v1321
        %v1323 = vpop.f32.mrf.mxu0
        %1324 = vdwg.mxu0
        %1325 = vmatprep.subr.bf16.mxu0 0
        %1326 = vmatpush1.bf16.msra.mxu0 %v1219
        %1327 = vmatprep.subr.bf16.mxu0 0
        %1328 = vmatpush1.bf16.msra.mxu0 %v1218
        %1329 = vmatprep.subr.bf16.mxu0 0
        %1330 = vmatpush1.bf16.msra.mxu0 %v1217
        %1331 = vmatprep.subr.bf16.mxu0 0
        %1332 = vmatpush1.bf16.msra.mxu0 %v1216
        %1333 = vmatprep.subr.bf16.mxu0 0
        %1334 = vmatpush1.bf16.msra.mxu0 %v1215
        %1335 = vmatprep.subr.bf16.mxu0 0
        %1336 = vmatpush1.bf16.msra.mxu0 %v1214
        %1337 = vmatprep.subr.bf16.mxu0 0
        %1338 = vmatpush1.bf16.msra.mxu0 %v1213
        %1339 = vmatprep.subr.bf16.mxu0 0
        %1340 = vmatpush1.bf16.msra.mxu0 %v1212
        %1341 = vmatprep.subr.bf16.mxu0 0
        %1342 = vmatpush2.bf16.msra.mxu0 %v1227
        %1343 = vmatprep.subr.bf16.mxu0 0
        %1344 = vmatpush2.bf16.msra.mxu0 %v1226
        %1345 = vmatprep.subr.bf16.mxu0 0
        %1346 = vmatpush2.bf16.msra.mxu0 %v1225
        %1347 = vmatprep.subr.bf16.mxu0 0
        %1348 = vmatpush2.bf16.msra.mxu0 %v1224
        %1349 = vmatprep.subr.bf16.mxu0 0
        %1350 = vmatpush2.bf16.msra.mxu0 %v1223
        %1351 = vmatprep.subr.bf16.mxu0 0
        %1352 = vmatpush2.bf16.msra.mxu0 %v1222
        %1353 = vmatprep.subr.bf16.mxu0 0
        %1354 = vmatpush2.bf16.msra.mxu0 %v1221
        %1355 = vmatprep.subr.bf16.mxu0 0
        %1356 = vmatpush2.bf16.msra.mxu0 %v1220
        %1357 = vmatprep.mubr.bf16.mxu0 %v984
        %1358 = vmatmul.mubr.bf16.gmra.mxu0 %v983
        %v1359 = vpop.f32.mrf.mxu0
        %v1360 = vadd.f32 %v1295, %v1359
        %v1361 = vpop.f32.mrf.mxu0
        %v1362 = vpop.f32.mrf.mxu0
        %v1363 = vadd.f32 %v1298, %v1362
        %v1364 = vpop.f32.mrf.mxu0
        %1365 = vmatprep.mubr.bf16.mxu0 %v988
        %1366 = vmatmul.mubr.bf16.gmra.mxu0 %v987
        %v1367 = vpop.f32.mrf.mxu0
        %v1368 = vadd.f32 %v1303, %v1367
        %v1369 = vpop.f32.mrf.mxu0
        %v1370 = vpop.f32.mrf.mxu0
        %v1371 = vadd.f32 %v1306, %v1370
        %v1372 = vpop.f32.mrf.mxu0
        %1373 = vmatprep.mubr.bf16.mxu0 %v992
        %1374 = vmatmul.mubr.bf16.gmra.mxu0 %v991
        %v1375 = vpop.f32.mrf.mxu0
        %v1376 = vadd.f32 %v1311, %v1375
        %v1377 = vpop.f32.mrf.mxu0
        %v1378 = vpop.f32.mrf.mxu0
        %v1379 = vadd.f32 %v1314, %v1378
        %v1380 = vpop.f32.mrf.mxu0
        %1381 = vmatprep.mubr.bf16.mxu0 %v996
        %1382 = vmatmul.mubr.bf16.gmra.mxu0 %v995
        %v1383 = vpop.f32.mrf.mxu0
        %v1384 = vadd.f32 %v1319, %v1383
        %v1385 = vpop.f32.mrf.mxu0
        %v1386 = vpop.f32.mrf.mxu0
        %v1387 = vadd.f32 %v1322, %v1386
        %v1388 = vpop.f32.mrf.mxu0
        %1389 = vdwg.mxu0
        %v1390 = vadd.f32 %v1360, %v577
        %v1391 = vadd.f32 %v1363, %v578
        %v1392 = vadd.f32 %v1368, %v579
        %v1393 = vadd.f32 %v1371, %v580
        %v1394 = vadd.f32 %v1376, %v581
        %v1395 = vadd.f32 %v1379, %v582
        %v1396 = vadd.f32 %v1384, %v583
        %v1397 = vadd.f32 %v1387, %v584
        %1398 = vst [vmem:[#allocation2] sm:$0xff] %v1390
        %1399 = vst [vmem:[#allocation2 + $0x8] sm:$0xff] %v1391
        %1400 = vst [vmem:[#allocation2 + $0x10] sm:$0xff] %v1392
        %1401 = vst [vmem:[#allocation2 + $0x18] sm:$0xff] %v1393
        %1402 = vst [vmem:[#allocation2 + $0x20] sm:$0xff] %v1394
        %1403 = vst [vmem:[#allocation2 + $0x28] sm:$0xff] %v1395
        %1404 = vst [vmem:[#allocation2 + $0x30] sm:$0xff] %v1396
        %1405 = vst [vmem:[#allocation2 + $0x38] sm:$0xff] %v1397
        %p1406 = scmp.eq.s32.totalorder %s31, 2
        // Predicated region
        $region69: #{deepnet_forward.1} parent=55 // pred_check
          %p1407 = pneg %p1406
        $region70: #{deepnet_forward.1} parent=55 // pred_check_branch
          %1409 = sbr.rel (%p1407) target = $region72
        $region71: #{deepnet_forward.1} parent=55 // pred_region
          %v1410 = vpack.c.bf16 %v1391, %v1390
          %v1411 = vpack.c.bf16 %v1393, %v1392
          %v1412 = vpack.c.bf16 %v1395, %v1394
          %v1413 = vpack.c.bf16 %v1397, %v1396
          %v1414 = vld [vmem:[%s7] sm:$0xf]
          %v1415 = vld [vmem:[%s7 + $0x4] sm:$0xf]
          %v1416 = vld [vmem:[%s7 + $0x8] sm:$0xf]
          %v1417 = vld [vmem:[%s7 + $0xc] sm:$0xf]
          %v1418 = vld [vmem:[%s7 + $0x10] sm:$0xf]
          %v1419 = vld [vmem:[%s7 + $0x14] sm:$0xf]
          %v1420 = vld [vmem:[%s7 + $0x18] sm:$0xf]
          %v1421 = vld [vmem:[%s7 + $0x1c] sm:$0xf]
          %v1422 = vld [vmem:[%s7 + $0x20] sm:$0xf]
          %v1423 = vld [vmem:[%s7 + $0x24] sm:$0xf]
          %v1424 = vld [vmem:[%s7 + $0x28] sm:$0xf]
          %v1425 = vld [vmem:[%s7 + $0x2c] sm:$0xf]
          %v1426 = vld [vmem:[%s7 + $0x30] sm:$0xf]
          %v1427 = vld [vmem:[%s7 + $0x34] sm:$0xf]
          %v1428 = vld [vmem:[%s7 + $0x38] sm:$0xf]
          %v1429 = vld [vmem:[%s7 + $0x3c] sm:$0xf]
          %v1430 = vld [vmem:[%s8] sm:$0x1]
          %v1432 = vlaneseq
          %v1433 = vshrl.u32 %v1432, 7
          %v1434 = vsub.s32 0, %v1433
          %v1435 = vrot.slane %v1430, %v1434
          %v1453 = vunpack.c.l.b16 %v1414
          %v1454 = vunpack.c.l.b16 %v1415
          %v1455 = vunpack.c.l.b16 %v1416
          %v1456 = vunpack.c.l.b16 %v1417
          %v1457 = vunpack.c.l.b16 %v1418
          %v1458 = vunpack.c.l.b16 %v1419
          %v1459 = vunpack.c.l.b16 %v1420
          %v1460 = vunpack.c.l.b16 %v1421
          %v1461 = vunpack.c.l.b16 %v1422
          %v1462 = vunpack.c.l.b16 %v1423
          %v1463 = vunpack.c.l.b16 %v1424
          %v1464 = vunpack.c.l.b16 %v1425
          %v1465 = vunpack.c.l.b16 %v1426
          %v1466 = vunpack.c.l.b16 %v1427
          %v1467 = vunpack.c.l.b16 %v1428
          %v1468 = vunpack.c.l.b16 %v1429
          %v1469 = vpack.c.b16 %v1454, %v1453
          %v1470 = vpack.c.b16 %v1456, %v1455
          %v1471 = vpack.c.b16 %v1458, %v1457
          %v1472 = vpack.c.b16 %v1460, %v1459
          %v1473 = vpack.c.b16 %v1462, %v1461
          %v1474 = vpack.c.b16 %v1464, %v1463
          %v1475 = vpack.c.b16 %v1466, %v1465
          %v1476 = vpack.c.b16 %v1468, %v1467
          %1485 = vmatprep.subr.bf16.mxu0 0
          %1486 = vmatpush1.bf16.msra.mxu0 %v1476
          %1487 = vmatprep.subr.bf16.mxu0 0
          %1488 = vmatpush1.bf16.msra.mxu0 %v1475
          %1489 = vmatprep.subr.bf16.mxu0 0
          %1490 = vmatpush1.bf16.msra.mxu0 %v1474
          %1491 = vmatprep.subr.bf16.mxu0 0
          %1492 = vmatpush1.bf16.msra.mxu0 %v1473
          %1493 = vmatprep.subr.bf16.mxu0 0
          %1494 = vmatpush1.bf16.msra.mxu0 %v1472
          %1495 = vmatprep.subr.bf16.mxu0 0
          %1496 = vmatpush1.bf16.msra.mxu0 %v1471
          %1497 = vmatprep.subr.bf16.mxu0 0
          %1498 = vmatpush1.bf16.msra.mxu0 %v1470
          %1499 = vmatprep.subr.bf16.mxu0 0
          %1500 = vmatpush1.bf16.msra.mxu0 %v1469
          %1501 = vmatprep.subr.bf16.mxu0 0
          %1502 = vmatpush2.bf16.msra.mxu0 0
          %1503 = vmatprep.subr.bf16.mxu0 0
          %1504 = vmatpush2.bf16.msra.mxu0 0
          %1505 = vmatprep.subr.bf16.mxu0 0
          %1506 = vmatpush2.bf16.msra.mxu0 0
          %1507 = vmatprep.subr.bf16.mxu0 0
          %1508 = vmatpush2.bf16.msra.mxu0 0
          %1509 = vmatprep.subr.bf16.mxu0 0
          %1510 = vmatpush2.bf16.msra.mxu0 0
          %1511 = vmatprep.subr.bf16.mxu0 0
          %1512 = vmatpush2.bf16.msra.mxu0 0
          %1513 = vmatprep.subr.bf16.mxu0 0
          %1514 = vmatpush2.bf16.msra.mxu0 0
          %1515 = vmatprep.subr.bf16.mxu0 0
          %1516 = vmatpush2.bf16.msra.mxu0 0
          %1517 = vmatprep.mubr.bf16.mxu0 0
          %1518 = vmatmul.mubr.bf16.gmra.mxu0 %v1410
          %v1519 = vpop.f32.mrf.mxu0
          %v1520 = vadd.f32 %v1435, %v1519
          %v1521 = vpop.f32.mrf.mxu0
          %v1522 = vpop.f32.mrf.mxu0
          %v1523 = vadd.f32 %v1435, %v1522
          %v1524 = vpop.f32.mrf.mxu0
          %1525 = vmatprep.mubr.bf16.mxu0 0
          %1526 = vmatmul.mubr.bf16.gmra.mxu0 %v1411
          %v1527 = vpop.f32.mrf.mxu0
          %v1528 = vadd.f32 %v1435, %v1527
          %v1529 = vpop.f32.mrf.mxu0
          %v1530 = vpop.f32.mrf.mxu0
          %v1531 = vadd.f32 %v1435, %v1530
          %v1532 = vpop.f32.mrf.mxu0
          %1533 = vmatprep.mubr.bf16.mxu0 0
          %1534 = vmatmul.mubr.bf16.gmra.mxu0 %v1412
          %v1535 = vpop.f32.mrf.mxu0
          %v1536 = vadd.f32 %v1435, %v1535
          %v1537 = vpop.f32.mrf.mxu0
          %v1538 = vpop.f32.mrf.mxu0
          %v1539 = vadd.f32 %v1435, %v1538
          %v1540 = vpop.f32.mrf.mxu0
          %1541 = vmatprep.mubr.bf16.mxu0 0
          %1542 = vmatmul.mubr.bf16.gmra.mxu0 %v1413
          %v1543 = vpop.f32.mrf.mxu0
          %v1544 = vadd.f32 %v1435, %v1543
          %v1545 = vpop.f32.mrf.mxu0
          %v1546 = vpop.f32.mrf.mxu0
          %v1547 = vadd.f32 %v1435, %v1546
          %v1548 = vpop.f32.mrf.mxu0
          %1549 = vdwg.mxu0
          %1550 = vst [vmem:[%s457] sm:$0xff] %v1520
          %1551 = vst [vmem:[%s457 + $0x8] sm:$0xff] %v1523
          %1552 = vst [vmem:[%s457 + $0x10] sm:$0xff] %v1528
          %1553 = vst [vmem:[%s457 + $0x18] sm:$0xff] %v1531
          %1554 = vst [vmem:[%s457 + $0x20] sm:$0xff] %v1536
          %1555 = vst [vmem:[%s457 + $0x28] sm:$0xff] %v1539
          %1556 = vst [vmem:[%s457 + $0x30] sm:$0xff] %v1544
          %1557 = vst [vmem:[%s457 + $0x38] sm:$0xff] %v1547
        $region72: #{deepnet_forward.1} parent=55 // pred_fallthru
          _
        %s1558 = smul.u32 8, %s30
        %p1559 = scmp.lt.s32.totalorder %s1558, 7
        %s1560 = scalar_select %p1559, %s1558, 7
        %s1561 = smul.addr %s1560, 8
        %s1562 = scalar_lea.vmem %s9, %s1561
        // Predicated region
        $region73: #{deepnet_forward.1} parent=55 // pred_check
          %p1563 = pneg %p270
        $region74: #{deepnet_forward.1} parent=55 // pred_check_branch
          %1565 = sbr.rel (%p1563) target = $region76
        $region75: #{deepnet_forward.1} parent=55 // pred_region
          %s1566 = smul.u32 8, %s30
        $region76: #{deepnet_forward.1} parent=55 // pred_fallthru
          _
        // Predicated region
        $region77: #{deepnet_forward.1} parent=55 // pred_check
          %p1567 = pneg %p270
        $region78: #{deepnet_forward.1} parent=55 // pred_check_branch
          %1569 = sbr.rel (%p1567) target = $region80
        $region79: #{deepnet_forward.1} parent=55 // pred_region
          %s1570 = smul.u32 8, %s30
          %p1571 = scmp.lt.s32.totalorder %s1570, 7
          %s1572 = scalar_select %p1571, %s1570, 7
          %s1573 = smul.addr %s1572, 8
          %s1574 = scalar_lea.vmem %s9, %s1573
        $region80: #{deepnet_forward.1} parent=55 // pred_fallthru
          _
      $region56: #{deepnet_forward.1} parent=5 // pred_fallthru
        _
      %p1575 = scmp.le.s32.totalorder 2, %s21
      // Predicated region
      $region81: #{deepnet_forward.1} parent=5 // pred_check
        %p1576 = pneg %p1575
      $region82: #{deepnet_forward.1} parent=5 // pred_check_branch
        %1578 = sbr.rel (%p1576) target = $region84
      $region83: #{deepnet_forward.1} parent=5 // pred_region
        %s1579 = ssub.s32 %s21, 2
      $region84: #{deepnet_forward.1} parent=5 // pred_fallthru
        _
    $region6: #{deepnet_forward.1} parent=1 // loop_footer
      %s25 = sadd.s32 1, %s21
    $region7: #{deepnet_forward.1} parent=1 // loop_footer_branch
      %20 = sbr.rel target = $region3
    $region8: #{deepnet_forward.1} parent=1 // loop_exit
      _
    %1580 = vsyncpa [#allocation4], 1
    %s1581 = scalar_lea.sflag [#allocation4], 1
    %1582 = vsyncpa %s1581, 1
    %1583 = vsyncpa [#allocation6], 1
    %s1584 = scalar_lea.sflag [#allocation6], 1
    %1585 = vsyncpa %s1584, 1

</llo_original>
